<compile_context>
chip_gen: v5e
topology: v5e:2x2
jax: 0.10.0
libtpu: 0.0.40
codegen_flags: <defaults>
</compile_context>

<pallas_src>
import functools

import numpy as np
import jax
import jax.numpy as jnp
from jax.experimental import pallas as pl
from jax.experimental.pallas import tpu as pltpu

LN_EPS = 1e-5                      # torch.nn.LayerNorm default eps
GRID_MIN, GRID_MAX = -2.0, 2.0     # FastKAN RadialBasisFunction defaults


# ----------------------------------------------------------------------------
# Generation-aware VMEM budget & tile targets
# ----------------------------------------------------------------------------
def _tpu_vmem_capacity_bytes():
    try:
        return int(pltpu.get_tpu_info().vmem_capacity_bytes)
    except Exception:
        return 64 * 1024 * 1024  # conservative (v7x-sized) fallback

_VMEM_CAP = _tpu_vmem_capacity_bytes()
_VMEM_LIMIT = min(int(_VMEM_CAP * 0.80), 100 * 1024 * 1024)
_ROW_TILE_TARGET = 512 if _VMEM_CAP >= 100 * 1024 * 1024 else 256
_LANE_TILE_TARGET = 1024


def _supports_pipeline_mode():
    try:
        pl.BlockSpec((8, 128), lambda i: (0, 0), pipeline_mode=pl.Buffered(1))
        return True
    except Exception:
        return False

_SINGLE_BUFFER = _supports_pipeline_mode()


def _const_spec(block_shape, index_map):
    """Constant-index-map (resident weight) block: single-buffered so the
    revisited block does not pay the default 2x VMEM allocation."""
    if _SINGLE_BUFFER:
        return pl.BlockSpec(block_shape, index_map, pipeline_mode=pl.Buffered(1))
    return pl.BlockSpec(block_shape, index_map)


# ----------------------------------------------------------------------------
# Tile-size helpers
# ----------------------------------------------------------------------------
def _pick_row_tile(m, target):
    """Largest row tile <= target that divides m and is a multiple of 8.
    Returns 0 if no such divisor exists (caller pads the row dimension)."""
    if m <= target:
        return m
    for tm in range(target - target % 8, 7, -8):
        if m % tm == 0:
            return tm
    return 0


def _pick_lane_tile(d, target):
    """Largest lane tile <= target that divides d and is a multiple of 128."""
    if d <= target:
        return d
    for td in range(target - target % 128, 0, -128):
        if d % td == 0:
            return td
    return d  # fallback: single full-width block


def _grid_consts(num_grids):
    inv_denom = float((num_grids - 1) / (GRID_MAX - GRID_MIN))
    grid_scaled = tuple(float(v) * inv_denom
                        for v in np.linspace(GRID_MIN, GRID_MAX, num_grids))
    return grid_scaled, inv_denom


# ----------------------------------------------------------------------------
# Pallas kernels
# ----------------------------------------------------------------------------
def _fastkan_apply(h, ln_w, ln_b, sw_ref, bw, bb, grid_scaled, inv_denom):
    """FastKANLayer on rows of h (features on the lane axis).

    h: (TM, din) f32        sw_ref: (G, din, dout) bf16 Ref
    ln_w/ln_b: (1, din)     bw: (din, dout) bf16      bb: (1, dout) f32
    returns (TM, dout) f32
    """
    mean = jnp.mean(h, axis=-1, keepdims=True)
    var = jnp.mean(jnp.square(h - mean), axis=-1, keepdims=True)
    z = (h - mean) * jax.lax.rsqrt(var + LN_EPS)
    # Pre-scale once: exp(-((z - g) * inv_denom)^2) == exp(-(zs - gs)^2).
    zs = (z * ln_w + ln_b) * inv_denom

    # Base branch uses the *un-normalized* input (FastKAN semantics); cast once.
    acc = jnp.dot((h * jax.nn.sigmoid(h)).astype(jnp.bfloat16), bw,
                  preferred_element_type=jnp.float32) + bb

    # Spline branch: unrolled per-grid-value matmul accumulation.  No
    # (TM, G*din) basis materialization; K = din already fills the MXU.
    for g, gs in enumerate(grid_scaled):
        basis_g = jnp.exp(-jnp.square(zs - gs)).astype(jnp.bfloat16)
        acc = acc + jnp.dot(basis_g, sw_ref[g],
                            preferred_element_type=jnp.float32)
    return acc


def _ff_block_kernel(x_ref, postA_ref, postb_ref, gamma2_ref,
                     ln1w_ref, ln1b_ref, sw1_ref, bw1_ref, bb1_ref,
                     ln2w_ref, ln2b_ref, sw2_ref, bw2_ref, bb2_ref,
                     o_ref, *, grid_scaled, inv_denom):
    """post-Affine -> FastKAN(D->H) -> FastKAN(H->D) -> x + gamma_2 * out."""
    x = x_ref[...]                                           # (TM, D) f32
    h = x * postA_ref[...] + postb_ref[...]                  # fused post-Affine

    h1 = _fastkan_apply(h, ln1w_ref[...], ln1b_ref[...], sw1_ref,
                        bw1_ref[...], bb1_ref[...], grid_scaled, inv_denom)
    h2 = _fastkan_apply(h1, ln2w_ref[...], ln2b_ref[...], sw2_ref,
                        bw2_ref[...], bb2_ref[...], grid_scaled, inv_denom)

    o_ref[...] = x + gamma2_ref[...] * h2                    # fused LayerScale residual


def _token_block_kernel(x_ref, preA_ref, preb_ref, gamma1_ref,
                        lnw_ref, lnb_ref, swT_ref, bwT_ref, bb_ref,
                        o_ref, *, grid_scaled, inv_denom):
    """pre-Affine -> FastKAN over the token axis -> x + gamma_1 * out.

    Works directly in the (N, TD) layout (tokens on sublanes, channels on
    lanes), so no 'b n d -> b d n' transpose ever touches HBM.
    """
    x = x_ref[0]                                             # (N, TD) f32
    h = x * preA_ref[...] + preb_ref[...]                    # fused pre-Affine

    # LayerNorm over the token axis (axis 0), then pre-scale once.
    mean = jnp.mean(h, axis=0, keepdims=True)
    var = jnp.mean(jnp.square(h - mean), axis=0, keepdims=True)
    z = (h - mean) * jax.lax.rsqrt(var + LN_EPS)
    zs = (z * lnw_ref[...] + lnb_ref[...]) * inv_denom       # (N,1) broadcasts over lanes

    # Base branch: base_w^T @ SiLU(h) (left-multiplication in this layout).
    base_in = (h * jax.nn.sigmoid(h)).astype(jnp.bfloat16)
    acc = jnp.dot(bwT_ref[...], base_in,
                  preferred_element_type=jnp.float32) + bb_ref[...]

    # Spline branch: per-grid-value accumulation; swT_ref[g] is spline_w[g]^T.
    for g, gs in enumerate(grid_scaled):
        basis_g = jnp.exp(-jnp.square(zs - gs)).astype(jnp.bfloat16)   # (N, TD)
        acc = acc + jnp.dot(swT_ref[g], basis_g,
                            preferred_element_type=jnp.float32)        # (N, TD)

    o_ref[0] = x + gamma1_ref[...] * acc                     # fused LayerScale residual


# ----------------------------------------------------------------------------
# pallas_call wrappers
# ----------------------------------------------------------------------------
def token_block(x, kp):
    B, N, D = x.shape
    tok = kp["tok"]
    G = tok["spline_wT"].shape[0]
    TD = _pick_lane_tile(D, _LANE_TILE_TARGET)
    grid_scaled, inv_denom = _grid_consts(G)
    kernel = functools.partial(_token_block_kernel,
                               grid_scaled=grid_scaled, inv_denom=inv_denom)
    vec = lambda b, j: (0, j)        # (1, D) params, tiled along lanes with x
    return pl.pallas_call(
        kernel,
        out_shape=jax.ShapeDtypeStruct((B, N, D), jnp.float32),
        grid=(B, D // TD),
        in_specs=[
            pl.BlockSpec((1, N, TD), lambda b, j: (b, 0, j)),
            pl.BlockSpec((1, TD), vec),                        # pre_A
            pl.BlockSpec((1, TD), vec),                        # pre_b
            pl.BlockSpec((1, TD), vec),                        # gamma_1
            _const_spec((N, 1), lambda b, j: (0, 0)),          # ln_w (column vec)
            _const_spec((N, 1), lambda b, j: (0, 0)),          # ln_b
            _const_spec((G, N, N), lambda b, j: (0, 0, 0)),    # spline_w (g, out, in) bf16
            _const_spec((N, N), lambda b, j: (0, 0)),          # base_w^T bf16
            _const_spec((N, 1), lambda b, j: (0, 0)),          # base bias (column vec)
        ],
        out_specs=pl.BlockSpec((1, N, TD), lambda b, j: (b, 0, j)),
        compiler_params=pltpu.CompilerParams(
            dimension_semantics=("parallel", "parallel"),
            vmem_limit_bytes=_VMEM_LIMIT),
    )(x, kp["pre_A"], kp["pre_b"], kp["gamma_1"],
      tok["ln_w"], tok["ln_b"], tok["spline_wT"], tok["base_wT"], tok["base_b"])


def ff_block(x2d, kp):
    M, D = x2d.shape
    p0, p1 = kp["ff0"], kp["ff1"]
    H = p0["base_w"].shape[1]
    G = p0["spline_w"].shape[0]
    grid_scaled, inv_denom = _grid_consts(G)

    TM = _pick_row_tile(M, _ROW_TILE_TARGET)
    pad = 0
    if TM == 0:                       # no clean divisor: pad rows to a full tile
        TM = _ROW_TILE_TARGET
        pad = (-M) % TM
        x2d = jnp.pad(x2d, ((0, pad), (0, 0)))
    m_eff = M + pad

    kernel = functools.partial(_ff_block_kernel,
                               grid_scaled=grid_scaled, inv_denom=inv_denom)
    c2 = lambda i: (0, 0)
    c3 = lambda i: (0, 0, 0)
    out = pl.pallas_call(
        kernel,
        out_shape=jax.ShapeDtypeStruct((m_eff, D), jnp.float32),
        grid=(m_eff // TM,),
        in_specs=[
            pl.BlockSpec((TM, D), lambda i: (i, 0)),
            _const_spec((1, D), c2),          # post_A
            _const_spec((1, D), c2),          # post_b
            _const_spec((1, D), c2),          # gamma_2
            _const_spec((1, D), c2),          # ln1 weight
            _const_spec((1, D), c2),          # ln1 bias
            _const_spec((G, D, H), c3),       # spline1 (g, in, out) bf16
            _const_spec((D, H), c2),          # base1 bf16
            _const_spec((1, H), c2),          # base1 bias
            _const_spec((1, H), c2),          # ln2 weight
            _const_spec((1, H), c2),          # ln2 bias
            _const_spec((G, H, D), c3),       # spline2 (g, in, out) bf16
            _const_spec((H, D), c2),          # base2 bf16
            _const_spec((1, D), c2),          # base2 bias
        ],
        out_specs=pl.BlockSpec((TM, D), lambda i: (i, 0)),
        compiler_params=pltpu.CompilerParams(
            dimension_semantics=("parallel",),
            vmem_limit_bytes=_VMEM_LIMIT),
    )(x2d, kp["post_A"], kp["post_b"], kp["gamma_2"],
      p0["ln_w"], p0["ln_b"], p0["spline_w"], p0["base_w"], p0["base_b"],
      p1["ln_w"], p1["ln_b"], p1["spline_w"], p1["base_w"], p1["base_b"])
    return out[:M] if pad else out


def reskan_block(x, kp):
    """Forward pass of ResKANblock, Pallas-backed (two fused kernels)."""
    B, N, D = x.shape
    x = token_block(x, kp)                       # x + gamma_1 * token_mix(pre_affine(x))
    y = ff_block(x.reshape(B * N, D), kp)        # x + gamma_2 * ff(post_affine(x))
    return y.reshape(B, N, D)


# ----------------------------------------------------------------------------
# Parameter init (mirrors nn.Module shapes) + kernel-ready layout prep
# ----------------------------------------------------------------------------
def init_fastkan_layer(key, din, dout, num_grids, init_scale=0.1):
    k1, k2, k3 = jax.random.split(key, 3)
    bound = 1.0 / np.sqrt(din)
    return {
        "ln_w": jnp.ones((din,), jnp.float32),
        "ln_b": jnp.zeros((din,), jnp.float32),
        # torch SplineLinear weight is (dout, din*G) flattened din-major/G-minor;
        # stored here as (G, din, dout): spline_w[g, i, o] == W_torch[o, i*G + g].
        "spline_w": (init_scale * jax.random.truncated_normal(
            k1, -2.0, 2.0, (num_grids, din, dout))).astype(jnp.float32),
        "base_w": jax.random.uniform(k2, (din, dout), jnp.float32, -bound, bound),
        "base_b": jax.random.uniform(k3, (dout,), jnp.float32, -bound, bound),
    }


def init_reskan_block(key, num_patch, d_model, grid_size, expand, init_values):
    k_tok, k0, k1 = jax.random.split(key, 3)
    return {
        "pre_A": jnp.ones((d_model,), jnp.float32),
        "pre_b": jnp.zeros((d_model,), jnp.float32),
        "post_A": jnp.ones((d_model,), jnp.float32),
        "post_b": jnp.zeros((d_model,), jnp.float32),
        "gamma_1": jnp.full((d_model,), init_values, jnp.float32),
        "gamma_2": jnp.full((d_model,), init_values, jnp.float32),
        "tok": init_fastkan_layer(k_tok, num_patch, num_patch, grid_size),
        "ff0": init_fastkan_layer(k0, d_model, d_model * expand, grid_size),
        "ff1": init_fastkan_layer(k1, d_model * expand, d_model, grid_size),
    }


def _prep_ff_layer(p):
    G, din, dout = p["spline_w"].shape
    return {
        "ln_w": p["ln_w"].reshape(1, din),
        "ln_b": p["ln_b"].reshape(1, din),
        "spline_w": p["spline_w"].astype(jnp.bfloat16),          # (G, din, dout)
        "base_w": p["base_w"].astype(jnp.bfloat16),
        "base_b": p["base_b"].reshape(1, dout),
    }


def _prep_tok_layer(p):
    G, din, dout = p["spline_w"].shape          # din == dout == num_patch
    return {
        "ln_w": p["ln_w"].reshape(din, 1),
        "ln_b": p["ln_b"].reshape(din, 1),
        # (G, dout, din): spline_wT[g] == spline_w[g]^T for left-multiplication.
        "spline_wT": jnp.transpose(p["spline_w"], (0, 2, 1)).astype(jnp.bfloat16),
        "base_wT": p["base_w"].T.astype(jnp.bfloat16),
        "base_b": p["base_b"].reshape(dout, 1),
    }


def prepare_kernel_params(p):
    D = p["pre_A"].shape[0]
    return {
        "pre_A": p["pre_A"].reshape(1, D),
        "pre_b": p["pre_b"].reshape(1, D),
        "post_A": p["post_A"].reshape(1, D),
        "post_b": p["post_b"].reshape(1, D),
        "gamma_1": p["gamma_1"].reshape(1, D),
        "gamma_2": p["gamma_2"].reshape(1, D),
        "tok": _prep_tok_layer(p["tok"]),
        "ff0": _prep_ff_layer(p["ff0"]),
        "ff1": _prep_ff_layer(p["ff1"]),
    }


# ----------------------------------------------------------------------------
# Pure-JAX f32 reference (verification)
# ----------------------------------------------------------------------------
def fastkan_layer_ref(x2d, p):
    G = p["spline_w"].shape[0]
    grid = jnp.linspace(GRID_MIN, GRID_MAX, G)
    inv_denom = (G - 1) / (GRID_MAX - GRID_MIN)
    mean = x2d.mean(-1, keepdims=True)
    var = jnp.square(x2d - mean).mean(-1, keepdims=True)
    z = (x2d - mean) / jnp.sqrt(var + LN_EPS) * p["ln_w"] + p["ln_b"]
    basis = jnp.exp(-jnp.square((z[..., None] - grid) * inv_denom))     # (M, din, G)
    ret = jnp.einsum("mig,gio->mo", basis, p["spline_w"])
    base = (x2d * jax.nn.sigmoid(x2d)) @ p["base_w"] + p["base_b"]
    return ret + base


def reskan_block_ref(x, p):
    B, N, D = x.shape
    h = x * p["pre_A"] + p["pre_b"]
    t = jnp.transpose(h, (0, 2, 1)).reshape(B * D, N)
    t = fastkan_layer_ref(t, p["tok"])
    t = jnp.transpose(t.reshape(B, D, N), (0, 2, 1))
    x = x + p["gamma_1"] * t
    h = (x * p["post_A"] + p["post_b"]).reshape(B * N, D)
    h = fastkan_layer_ref(h, p["ff0"])
    h = fastkan_layer_ref(h, p["ff1"]).reshape(B, N, D)
    return x + p["gamma_2"] * h


# ----------------------------------------------------------------------------
if __name__ == "__main__":
    B, num_patch, d_model = 2, 8, 32
    grid_size, expand, init_values = 8, 2, 0.1

    key = jax.random.PRNGKey(0)
    k_x, k_p, k_a = jax.random.split(key, 3)
    x = jax.random.normal(k_x, (B, num_patch, d_model), jnp.float32)
    params = init_reskan_block(k_p, num_patch, d_model, grid_size, expand, init_values)

    # Perturb the affine params away from identity so the fused affine paths are
    # actually exercised by the numerical check (module inits them to 1/0).
    ka1, ka2, ka3, ka4 = jax.random.split(k_a, 4)
    params["pre_A"] = params["pre_A"] + 0.1 * jax.random.normal(ka1, (d_model,))
    params["pre_b"] = params["pre_b"] + 0.1 * jax.random.normal(ka2, (d_model,))
    params["post_A"] = params["post_A"] + 0.1 * jax.random.normal(ka3, (d_model,))
    params["post_b"] = params["post_b"] + 0.1 * jax.random.normal(ka4, (d_model,))

    kparams = prepare_kernel_params(params)
    out = jax.jit(reskan_block)(x, kparams)
    out = jax.block_until_ready(out)

    ref = reskan_block_ref(x, params)
    assert out.shape == (B, num_patch, d_model)
    err = float(jnp.max(jnp.abs(out - ref)))
    # bf16 matmul operands (f32 accumulation) -> slightly looser tolerance than f32.
    assert err < 2e-2, f"max abs err {err}"

    print("KERNEL_OK")
</pallas_src>

<mosaic_0001>
module attributes {stable_mosaic.version = 11 : i64} {
  func.func @_token_block_kernel(%arg0: i32, %arg1: i32, %arg2: memref<1x8x32xf32, #tpu.memory_space<vmem>>, %arg3: memref<1x32xf32, #tpu.memory_space<vmem>>, %arg4: memref<1x32xf32, #tpu.memory_space<vmem>>, %arg5: memref<1x32xf32, #tpu.memory_space<vmem>>, %arg6: memref<8x1xf32, #tpu.memory_space<vmem>>, %arg7: memref<8x1xf32, #tpu.memory_space<vmem>>, %arg8: memref<8x8x8xbf16, #tpu.memory_space<vmem>>, %arg9: memref<8x8xbf16, #tpu.memory_space<vmem>>, %arg10: memref<8x1xf32, #tpu.memory_space<vmem>>, %arg11: memref<1x8x32xf32, #tpu.memory_space<vmem>>) attributes {dimension_semantics = [#tpu.dimension_semantics<parallel>, #tpu.dimension_semantics<parallel>], iteration_bounds = array<i64: 2, 1>, scalar_prefetch = 0 : i64, scratch_operands = 0 : i64, tpu.core_type = #tpu.core_type<tc>, window_params = [{transform_indices = @transform_0, window_bounds = array<i64: 1, 8, 32>}, {transform_indices = @transform_1, window_bounds = array<i64: 1, 32>}, {transform_indices = @transform_2, window_bounds = array<i64: 1, 32>}, {transform_indices = @transform_3, window_bounds = array<i64: 1, 32>}, {pipeline_mode = #tpu.pipeline_mode<synchronous>, transform_indices = @transform_4, window_bounds = array<i64: 8, 1>}, {pipeline_mode = #tpu.pipeline_mode<synchronous>, transform_indices = @transform_5, window_bounds = array<i64: 8, 1>}, {pipeline_mode = #tpu.pipeline_mode<synchronous>, transform_indices = @transform_6, window_bounds = array<i64: 8, 8, 8>}, {pipeline_mode = #tpu.pipeline_mode<synchronous>, transform_indices = @transform_7, window_bounds = array<i64: 8, 8>}, {pipeline_mode = #tpu.pipeline_mode<synchronous>, transform_indices = @transform_8, window_bounds = array<i64: 8, 1>}, {transform_indices = @transform_9, window_bounds = array<i64: 1, 8, 32>}]} {
    %c0 = arith.constant 0 : index
    %c0_0 = arith.constant 0 : index
    %c0_1 = arith.constant 0 : index
    %0 = vector.load %arg2[%c0, %c0_0, %c0_1] : memref<1x8x32xf32, #tpu.memory_space<vmem>>, vector<1x8x32xf32>
    %1 = vector.shape_cast %0 : vector<1x8x32xf32> to vector<8x32xf32>
    %c0_2 = arith.constant 0 : index
    %c0_3 = arith.constant 0 : index
    %2 = vector.load %arg3[%c0_2, %c0_3] : memref<1x32xf32, #tpu.memory_space<vmem>>, vector<1x32xf32>
    %3 = vector.broadcast %2 : vector<1x32xf32> to vector<8x32xf32>
    %4 = arith.mulf %1, %3 : vector<8x32xf32>
    %c0_4 = arith.constant 0 : index
    %c0_5 = arith.constant 0 : index
    %5 = vector.load %arg4[%c0_4, %c0_5] : memref<1x32xf32, #tpu.memory_space<vmem>>, vector<1x32xf32>
    %6 = vector.broadcast %5 : vector<1x32xf32> to vector<8x32xf32>
    %7 = arith.addf %4, %6 : vector<8x32xf32>
    %cst = arith.constant dense<0.000000e+00> : vector<32xf32>
    %8 = vector.multi_reduction <add>, %7, %cst [0] : vector<8x32xf32> to vector<32xf32>
    %9 = vector.shape_cast %8 : vector<32xf32> to vector<1x32xf32>
    %cst_6 = arith.constant 8.000000e+00 : f32
    %10 = vector.broadcast %cst_6 : f32 to vector<1x32xf32>
    %11 = arith.divf %9, %10 : vector<1x32xf32>
    %12 = vector.broadcast %11 : vector<1x32xf32> to vector<8x32xf32>
    %13 = arith.subf %7, %12 : vector<8x32xf32>
    %14 = arith.mulf %13, %13 : vector<8x32xf32>
    %cst_7 = arith.constant dense<0.000000e+00> : vector<32xf32>
    %15 = vector.multi_reduction <add>, %14, %cst_7 [0] : vector<8x32xf32> to vector<32xf32>
    %16 = vector.shape_cast %15 : vector<32xf32> to vector<1x32xf32>
    %cst_8 = arith.constant 8.000000e+00 : f32
    %17 = vector.broadcast %cst_8 : f32 to vector<1x32xf32>
    %18 = arith.divf %16, %17 : vector<1x32xf32>
    %19 = vector.broadcast %11 : vector<1x32xf32> to vector<8x32xf32>
    %20 = arith.subf %7, %19 : vector<8x32xf32>
    %cst_9 = arith.constant 9.99999974E-6 : f32
    %21 = vector.broadcast %cst_9 : f32 to vector<1x32xf32>
    %22 = arith.addf %18, %21 : vector<1x32xf32>
    %23 = math.rsqrt %22 : vector<1x32xf32>
    %24 = vector.broadcast %23 : vector<1x32xf32> to vector<8x32xf32>
    %25 = arith.mulf %20, %24 : vector<8x32xf32>
    %c0_10 = arith.constant 0 : index
    %c0_11 = arith.constant 0 : index
    %26 = vector.load %arg6[%c0_10, %c0_11] : memref<8x1xf32, #tpu.memory_space<vmem>>, vector<8x1xf32>
    %27 = vector.broadcast %26 : vector<8x1xf32> to vector<8x32xf32>
    %28 = arith.mulf %25, %27 : vector<8x32xf32>
    %c0_12 = arith.constant 0 : index
    %c0_13 = arith.constant 0 : index
    %29 = vector.load %arg7[%c0_12, %c0_13] : memref<8x1xf32, #tpu.memory_space<vmem>>, vector<8x1xf32>
    %30 = vector.broadcast %29 : vector<8x1xf32> to vector<8x32xf32>
    %31 = arith.addf %28, %30 : vector<8x32xf32>
    %cst_14 = arith.constant 1.750000e+00 : f32
    %32 = vector.broadcast %cst_14 : f32 to vector<8x32xf32>
    %33 = arith.mulf %31, %32 : vector<8x32xf32>
    %34 = arith.negf %7 : vector<8x32xf32>
    %35 = math.exp %34 : vector<8x32xf32>
    %cst_15 = arith.constant 1.000000e+00 : f32
    %36 = vector.broadcast %cst_15 : f32 to vector<8x32xf32>
    %37 = arith.addf %36, %35 : vector<8x32xf32>
    %38 = arith.divf %36, %37 : vector<8x32xf32>
    %39 = arith.mulf %7, %38 : vector<8x32xf32>
    %40 = arith.truncf %39 : vector<8x32xf32> to vector<8x32xbf16>
    %c0_16 = arith.constant 0 : index
    %c0_17 = arith.constant 0 : index
    %41 = vector.load %arg9[%c0_16, %c0_17] : memref<8x8xbf16, #tpu.memory_space<vmem>>, vector<8x8xbf16>
    %cst_18 = arith.constant dense<0.000000e+00> : vector<8x32xf32>
    %42 = tpu.matmul %41, %40, %cst_18 {dimension_numbers = #tpu.dot_dimension_numbers<[1], [0], [0], [1], [0, 0, 1, 1], [], []>} : vector<8x8xbf16>, vector<8x32xbf16>, vector<8x32xf32> -> vector<8x32xf32>
    %c0_19 = arith.constant 0 : index
    %c0_20 = arith.constant 0 : index
    %43 = vector.load %arg10[%c0_19, %c0_20] : memref<8x1xf32, #tpu.memory_space<vmem>>, vector<8x1xf32>
    %44 = vector.broadcast %43 : vector<8x1xf32> to vector<8x32xf32>
    %45 = arith.addf %42, %44 : vector<8x32xf32>
    %cst_21 = arith.constant -3.500000e+00 : f32
    %46 = vector.broadcast %cst_21 : f32 to vector<8x32xf32>
    %47 = arith.subf %33, %46 : vector<8x32xf32>
    %48 = arith.mulf %47, %47 : vector<8x32xf32>
    %cst_22 = arith.constant 0.000000e+00 : f32
    %49 = vector.broadcast %cst_22 : f32 to vector<8x32xf32>
    %50 = arith.subf %49, %48 : vector<8x32xf32>
    %51 = math.exp %50 : vector<8x32xf32>
    %52 = arith.truncf %51 : vector<8x32xf32> to vector<8x32xbf16>
    %c0_23 = arith.constant 0 : index
    %c0_24 = arith.constant 0 : index
    %c0_25 = arith.constant 0 : index
    %53 = vector.load %arg8[%c0_23, %c0_24, %c0_25] : memref<8x8x8xbf16, #tpu.memory_space<vmem>>, vector<1x8x8xbf16>
    %54 = vector.shape_cast %53 : vector<1x8x8xbf16> to vector<8x8xbf16>
    %cst_26 = arith.constant dense<0.000000e+00> : vector<8x32xf32>
    %55 = tpu.matmul %54, %52, %cst_26 {dimension_numbers = #tpu.dot_dimension_numbers<[1], [0], [0], [1], [0, 0, 1, 1], [], []>} : vector<8x8xbf16>, vector<8x32xbf16>, vector<8x32xf32> -> vector<8x32xf32>
    %56 = arith.addf %45, %55 : vector<8x32xf32>
    %cst_27 = arith.constant -2.500000e+00 : f32
    %57 = vector.broadcast %cst_27 : f32 to vector<8x32xf32>
    %58 = arith.subf %33, %57 : vector<8x32xf32>
    %59 = arith.mulf %58, %58 : vector<8x32xf32>
    %cst_28 = arith.constant 0.000000e+00 : f32
    %60 = vector.broadcast %cst_28 : f32 to vector<8x32xf32>
    %61 = arith.subf %60, %59 : vector<8x32xf32>
    %62 = math.exp %61 : vector<8x32xf32>
    %63 = arith.truncf %62 : vector<8x32xf32> to vector<8x32xbf16>
    %c1 = arith.constant 1 : index
    %c0_29 = arith.constant 0 : index
    %c0_30 = arith.constant 0 : index
    %64 = vector.load %arg8[%c1, %c0_29, %c0_30] : memref<8x8x8xbf16, #tpu.memory_space<vmem>>, vector<1x8x8xbf16>
    %65 = vector.shape_cast %64 : vector<1x8x8xbf16> to vector<8x8xbf16>
    %cst_31 = arith.constant dense<0.000000e+00> : vector<8x32xf32>
    %66 = tpu.matmul %65, %63, %cst_31 {dimension_numbers = #tpu.dot_dimension_numbers<[1], [0], [0], [1], [0, 0, 1, 1], [], []>} : vector<8x8xbf16>, vector<8x32xbf16>, vector<8x32xf32> -> vector<8x32xf32>
    %67 = arith.addf %56, %66 : vector<8x32xf32>
    %cst_32 = arith.constant -1.500000e+00 : f32
    %68 = vector.broadcast %cst_32 : f32 to vector<8x32xf32>
    %69 = arith.subf %33, %68 : vector<8x32xf32>
    %70 = arith.mulf %69, %69 : vector<8x32xf32>
    %cst_33 = arith.constant 0.000000e+00 : f32
    %71 = vector.broadcast %cst_33 : f32 to vector<8x32xf32>
    %72 = arith.subf %71, %70 : vector<8x32xf32>
    %73 = math.exp %72 : vector<8x32xf32>
    %74 = arith.truncf %73 : vector<8x32xf32> to vector<8x32xbf16>
    %c2 = arith.constant 2 : index
    %c0_34 = arith.constant 0 : index
    %c0_35 = arith.constant 0 : index
    %75 = vector.load %arg8[%c2, %c0_34, %c0_35] : memref<8x8x8xbf16, #tpu.memory_space<vmem>>, vector<1x8x8xbf16>
    %76 = vector.shape_cast %75 : vector<1x8x8xbf16> to vector<8x8xbf16>
    %cst_36 = arith.constant dense<0.000000e+00> : vector<8x32xf32>
    %77 = tpu.matmul %76, %74, %cst_36 {dimension_numbers = #tpu.dot_dimension_numbers<[1], [0], [0], [1], [0, 0, 1, 1], [], []>} : vector<8x8xbf16>, vector<8x32xbf16>, vector<8x32xf32> -> vector<8x32xf32>
    %78 = arith.addf %67, %77 : vector<8x32xf32>
    %cst_37 = arith.constant -5.000000e-01 : f32
    %79 = vector.broadcast %cst_37 : f32 to vector<8x32xf32>
    %80 = arith.subf %33, %79 : vector<8x32xf32>
    %81 = arith.mulf %80, %80 : vector<8x32xf32>
    %cst_38 = arith.constant 0.000000e+00 : f32
    %82 = vector.broadcast %cst_38 : f32 to vector<8x32xf32>
    %83 = arith.subf %82, %81 : vector<8x32xf32>
    %84 = math.exp %83 : vector<8x32xf32>
    %85 = arith.truncf %84 : vector<8x32xf32> to vector<8x32xbf16>
    %c3 = arith.constant 3 : index
    %c0_39 = arith.constant 0 : index
    %c0_40 = arith.constant 0 : index
    %86 = vector.load %arg8[%c3, %c0_39, %c0_40] : memref<8x8x8xbf16, #tpu.memory_space<vmem>>, vector<1x8x8xbf16>
    %87 = vector.shape_cast %86 : vector<1x8x8xbf16> to vector<8x8xbf16>
    %cst_41 = arith.constant dense<0.000000e+00> : vector<8x32xf32>
    %88 = tpu.matmul %87, %85, %cst_41 {dimension_numbers = #tpu.dot_dimension_numbers<[1], [0], [0], [1], [0, 0, 1, 1], [], []>} : vector<8x8xbf16>, vector<8x32xbf16>, vector<8x32xf32> -> vector<8x32xf32>
    %89 = arith.addf %78, %88 : vector<8x32xf32>
    %cst_42 = arith.constant 5.000000e-01 : f32
    %90 = vector.broadcast %cst_42 : f32 to vector<8x32xf32>
    %91 = arith.subf %33, %90 : vector<8x32xf32>
    %92 = arith.mulf %91, %91 : vector<8x32xf32>
    %cst_43 = arith.constant 0.000000e+00 : f32
    %93 = vector.broadcast %cst_43 : f32 to vector<8x32xf32>
    %94 = arith.subf %93, %92 : vector<8x32xf32>
    %95 = math.exp %94 : vector<8x32xf32>
    %96 = arith.truncf %95 : vector<8x32xf32> to vector<8x32xbf16>
    %c4 = arith.constant 4 : index
    %c0_44 = arith.constant 0 : index
    %c0_45 = arith.constant 0 : index
    %97 = vector.load %arg8[%c4, %c0_44, %c0_45] : memref<8x8x8xbf16, #tpu.memory_space<vmem>>, vector<1x8x8xbf16>
    %98 = vector.shape_cast %97 : vector<1x8x8xbf16> to vector<8x8xbf16>
    %cst_46 = arith.constant dense<0.000000e+00> : vector<8x32xf32>
    %99 = tpu.matmul %98, %96, %cst_46 {dimension_numbers = #tpu.dot_dimension_numbers<[1], [0], [0], [1], [0, 0, 1, 1], [], []>} : vector<8x8xbf16>, vector<8x32xbf16>, vector<8x32xf32> -> vector<8x32xf32>
    %100 = arith.addf %89, %99 : vector<8x32xf32>
    %cst_47 = arith.constant 1.500000e+00 : f32
    %101 = vector.broadcast %cst_47 : f32 to vector<8x32xf32>
    %102 = arith.subf %33, %101 : vector<8x32xf32>
    %103 = arith.mulf %102, %102 : vector<8x32xf32>
    %cst_48 = arith.constant 0.000000e+00 : f32
    %104 = vector.broadcast %cst_48 : f32 to vector<8x32xf32>
    %105 = arith.subf %104, %103 : vector<8x32xf32>
    %106 = math.exp %105 : vector<8x32xf32>
    %107 = arith.truncf %106 : vector<8x32xf32> to vector<8x32xbf16>
    %c5 = arith.constant 5 : index
    %c0_49 = arith.constant 0 : index
    %c0_50 = arith.constant 0 : index
    %108 = vector.load %arg8[%c5, %c0_49, %c0_50] : memref<8x8x8xbf16, #tpu.memory_space<vmem>>, vector<1x8x8xbf16>
    %109 = vector.shape_cast %108 : vector<1x8x8xbf16> to vector<8x8xbf16>
    %cst_51 = arith.constant dense<0.000000e+00> : vector<8x32xf32>
    %110 = tpu.matmul %109, %107, %cst_51 {dimension_numbers = #tpu.dot_dimension_numbers<[1], [0], [0], [1], [0, 0, 1, 1], [], []>} : vector<8x8xbf16>, vector<8x32xbf16>, vector<8x32xf32> -> vector<8x32xf32>
    %111 = arith.addf %100, %110 : vector<8x32xf32>
    %cst_52 = arith.constant 2.500000e+00 : f32
    %112 = vector.broadcast %cst_52 : f32 to vector<8x32xf32>
    %113 = arith.subf %33, %112 : vector<8x32xf32>
    %114 = arith.mulf %113, %113 : vector<8x32xf32>
    %cst_53 = arith.constant 0.000000e+00 : f32
    %115 = vector.broadcast %cst_53 : f32 to vector<8x32xf32>
    %116 = arith.subf %115, %114 : vector<8x32xf32>
    %117 = math.exp %116 : vector<8x32xf32>
    %118 = arith.truncf %117 : vector<8x32xf32> to vector<8x32xbf16>
    %c6 = arith.constant 6 : index
    %c0_54 = arith.constant 0 : index
    %c0_55 = arith.constant 0 : index
    %119 = vector.load %arg8[%c6, %c0_54, %c0_55] : memref<8x8x8xbf16, #tpu.memory_space<vmem>>, vector<1x8x8xbf16>
    %120 = vector.shape_cast %119 : vector<1x8x8xbf16> to vector<8x8xbf16>
    %cst_56 = arith.constant dense<0.000000e+00> : vector<8x32xf32>
    %121 = tpu.matmul %120, %118, %cst_56 {dimension_numbers = #tpu.dot_dimension_numbers<[1], [0], [0], [1], [0, 0, 1, 1], [], []>} : vector<8x8xbf16>, vector<8x32xbf16>, vector<8x32xf32> -> vector<8x32xf32>
    %122 = arith.addf %111, %121 : vector<8x32xf32>
    %cst_57 = arith.constant 3.500000e+00 : f32
    %123 = vector.broadcast %cst_57 : f32 to vector<8x32xf32>
    %124 = arith.subf %33, %123 : vector<8x32xf32>
    %125 = arith.mulf %124, %124 : vector<8x32xf32>
    %cst_58 = arith.constant 0.000000e+00 : f32
    %126 = vector.broadcast %cst_58 : f32 to vector<8x32xf32>
    %127 = arith.subf %126, %125 : vector<8x32xf32>
    %128 = math.exp %127 : vector<8x32xf32>
    %129 = arith.truncf %128 : vector<8x32xf32> to vector<8x32xbf16>
    %c7 = arith.constant 7 : index
    %c0_59 = arith.constant 0 : index
    %c0_60 = arith.constant 0 : index
    %130 = vector.load %arg8[%c7, %c0_59, %c0_60] : memref<8x8x8xbf16, #tpu.memory_space<vmem>>, vector<1x8x8xbf16>
    %131 = vector.shape_cast %130 : vector<1x8x8xbf16> to vector<8x8xbf16>
    %cst_61 = arith.constant dense<0.000000e+00> : vector<8x32xf32>
    %132 = tpu.matmul %131, %129, %cst_61 {dimension_numbers = #tpu.dot_dimension_numbers<[1], [0], [0], [1], [0, 0, 1, 1], [], []>} : vector<8x8xbf16>, vector<8x32xbf16>, vector<8x32xf32> -> vector<8x32xf32>
    %133 = arith.addf %122, %132 : vector<8x32xf32>
    %c0_62 = arith.constant 0 : index
    %c0_63 = arith.constant 0 : index
    %134 = vector.load %arg5[%c0_62, %c0_63] : memref<1x32xf32, #tpu.memory_space<vmem>>, vector<1x32xf32>
    %135 = vector.broadcast %134 : vector<1x32xf32> to vector<8x32xf32>
    %136 = arith.mulf %135, %133 : vector<8x32xf32>
    %137 = arith.addf %1, %136 : vector<8x32xf32>
    %c0_64 = arith.constant 0 : index
    %c0_65 = arith.constant 0 : index
    %c0_66 = arith.constant 0 : index
    %138 = vector.load %arg11[%c0_64, %c0_65, %c0_66] : memref<1x8x32xf32, #tpu.memory_space<vmem>>, vector<1x8x32xf32>
    %139 = vector.shape_cast %138 : vector<1x8x32xf32> to vector<8x32xf32>
    %140 = vector.shape_cast %137 : vector<8x32xf32> to vector<1x8x32xf32>
    tpu.vector_store %arg11[%c0_64, %c0_65, %c0_66], %140 {strides = array<i32>} : memref<1x8x32xf32, #tpu.memory_space<vmem>>, vector<1x8x32xf32>,
    return
  }
  func.func @transform_0(%arg0: i32, %arg1: i32) -> (i32, i32, i32) {
    %c0_i32 = arith.constant 0 : i32
    %c0_i32_0 = arith.constant 0 : i32
    return %arg0, %c0_i32, %arg1 : i32, i32, i32
  }
  func.func @transform_1(%arg0: i32, %arg1: i32) -> (i32, i32) {
    %c0_i32 = arith.constant 0 : i32
    %c0_i32_0 = arith.constant 0 : i32
    return %c0_i32, %arg1 : i32, i32
  }
  func.func @transform_2(%arg0: i32, %arg1: i32) -> (i32, i32) {
    %c0_i32 = arith.constant 0 : i32
    %c0_i32_0 = arith.constant 0 : i32
    return %c0_i32, %arg1 : i32, i32
  }
  func.func @transform_3(%arg0: i32, %arg1: i32) -> (i32, i32) {
    %c0_i32 = arith.constant 0 : i32
    %c0_i32_0 = arith.constant 0 : i32
    return %c0_i32, %arg1 : i32, i32
  }
  func.func @transform_4(%arg0: i32, %arg1: i32) -> (i32, i32) {
    %c0_i32 = arith.constant 0 : i32
    %c0_i32_0 = arith.constant 0 : i32
    %c0_i32_1 = arith.constant 0 : i32
    return %c0_i32, %c0_i32_0 : i32, i32
  }
  func.func @transform_5(%arg0: i32, %arg1: i32) -> (i32, i32) {
    %c0_i32 = arith.constant 0 : i32
    %c0_i32_0 = arith.constant 0 : i32
    %c0_i32_1 = arith.constant 0 : i32
    return %c0_i32, %c0_i32_0 : i32, i32
  }
  func.func @transform_6(%arg0: i32, %arg1: i32) -> (i32, i32, i32) {
    %c0_i32 = arith.constant 0 : i32
    %c0_i32_0 = arith.constant 0 : i32
    %c0_i32_1 = arith.constant 0 : i32
    %c0_i32_2 = arith.constant 0 : i32
    return %c0_i32, %c0_i32_0, %c0_i32_1 : i32, i32, i32
  }
  func.func @transform_7(%arg0: i32, %arg1: i32) -> (i32, i32) {
    %c0_i32 = arith.constant 0 : i32
    %c0_i32_0 = arith.constant 0 : i32
    %c0_i32_1 = arith.constant 0 : i32
    return %c0_i32, %c0_i32_0 : i32, i32
  }
  func.func @transform_8(%arg0: i32, %arg1: i32) -> (i32, i32) {
    %c0_i32 = arith.constant 0 : i32
    %c0_i32_0 = arith.constant 0 : i32
    %c0_i32_1 = arith.constant 0 : i32
    return %c0_i32, %c0_i32_0 : i32, i32
  }
  func.func @transform_9(%arg0: i32, %arg1: i32) -> (i32, i32, i32) {
    %c0_i32 = arith.constant 0 : i32
    %c0_i32_0 = arith.constant 0 : i32
    return %arg0, %c0_i32, %arg1 : i32, i32, i32
  }
}

module attributes {stable_mosaic.version = 11 : i64} {
  func.func @_ff_block_kernel(%arg0: i32, %arg1: memref<16x32xf32, #tpu.memory_space<vmem>>, %arg2: memref<1x32xf32, #tpu.memory_space<vmem>>, %arg3: memref<1x32xf32, #tpu.memory_space<vmem>>, %arg4: memref<1x32xf32, #tpu.memory_space<vmem>>, %arg5: memref<1x32xf32, #tpu.memory_space<vmem>>, %arg6: memref<1x32xf32, #tpu.memory_space<vmem>>, %arg7: memref<8x32x64xbf16, #tpu.memory_space<vmem>>, %arg8: memref<32x64xbf16, #tpu.memory_space<vmem>>, %arg9: memref<1x64xf32, #tpu.memory_space<vmem>>, %arg10: memref<1x64xf32, #tpu.memory_space<vmem>>, %arg11: memref<1x64xf32, #tpu.memory_space<vmem>>, %arg12: memref<8x64x32xbf16, #tpu.memory_space<vmem>>, %arg13: memref<64x32xbf16, #tpu.memory_space<vmem>>, %arg14: memref<1x32xf32, #tpu.memory_space<vmem>>, %arg15: memref<16x32xf32, #tpu.memory_space<vmem>>) attributes {dimension_semantics = [#tpu.dimension_semantics<parallel>], iteration_bounds = array<i64: 1>, scalar_prefetch = 0 : i64, scratch_operands = 0 : i64, tpu.core_type = #tpu.core_type<tc>, window_params = [{transform_indices = @transform_0, window_bounds = array<i64: 16, 32>}, {pipeline_mode = #tpu.pipeline_mode<synchronous>, transform_indices = @transform_1, window_bounds = array<i64: 1, 32>}, {pipeline_mode = #tpu.pipeline_mode<synchronous>, transform_indices = @transform_2, window_bounds = array<i64: 1, 32>}, {pipeline_mode = #tpu.pipeline_mode<synchronous>, transform_indices = @transform_3, window_bounds = array<i64: 1, 32>}, {pipeline_mode = #tpu.pipeline_mode<synchronous>, transform_indices = @transform_4, window_bounds = array<i64: 1, 32>}, {pipeline_mode = #tpu.pipeline_mode<synchronous>, transform_indices = @transform_5, window_bounds = array<i64: 1, 32>}, {pipeline_mode = #tpu.pipeline_mode<synchronous>, transform_indices = @transform_6, window_bounds = array<i64: 8, 32, 64>}, {pipeline_mode = #tpu.pipeline_mode<synchronous>, transform_indices = @transform_7, window_bounds = array<i64: 32, 64>}, {pipeline_mode = #tpu.pipeline_mode<synchronous>, transform_indices = @transform_8, window_bounds = array<i64: 1, 64>}, {pipeline_mode = #tpu.pipeline_mode<synchronous>, transform_indices = @transform_9, window_bounds = array<i64: 1, 64>}, {pipeline_mode = #tpu.pipeline_mode<synchronous>, transform_indices = @transform_10, window_bounds = array<i64: 1, 64>}, {pipeline_mode = #tpu.pipeline_mode<synchronous>, transform_indices = @transform_11, window_bounds = array<i64: 8, 64, 32>}, {pipeline_mode = #tpu.pipeline_mode<synchronous>, transform_indices = @transform_12, window_bounds = array<i64: 64, 32>}, {pipeline_mode = #tpu.pipeline_mode<synchronous>, transform_indices = @transform_13, window_bounds = array<i64: 1, 32>}, {transform_indices = @transform_14, window_bounds = array<i64: 16, 32>}]} {
    %c0 = arith.constant 0 : index
    %c0_0 = arith.constant 0 : index
    %0 = vector.load %arg1[%c0, %c0_0] : memref<16x32xf32, #tpu.memory_space<vmem>>, vector<16x32xf32>
    %c0_1 = arith.constant 0 : index
    %c0_2 = arith.constant 0 : index
    %1 = vector.load %arg2[%c0_1, %c0_2] : memref<1x32xf32, #tpu.memory_space<vmem>>, vector<1x32xf32>
    %2 = vector.broadcast %1 : vector<1x32xf32> to vector<16x32xf32>
    %3 = arith.mulf %0, %2 : vector<16x32xf32>
    %c0_3 = arith.constant 0 : index
    %c0_4 = arith.constant 0 : index
    %4 = vector.load %arg3[%c0_3, %c0_4] : memref<1x32xf32, #tpu.memory_space<vmem>>, vector<1x32xf32>
    %5 = vector.broadcast %4 : vector<1x32xf32> to vector<16x32xf32>
    %6 = arith.addf %3, %5 : vector<16x32xf32>
    %c0_5 = arith.constant 0 : index
    %c0_6 = arith.constant 0 : index
    %7 = vector.load %arg5[%c0_5, %c0_6] : memref<1x32xf32, #tpu.memory_space<vmem>>, vector<1x32xf32>
    %c0_7 = arith.constant 0 : index
    %c0_8 = arith.constant 0 : index
    %8 = vector.load %arg6[%c0_7, %c0_8] : memref<1x32xf32, #tpu.memory_space<vmem>>, vector<1x32xf32>
    %c0_9 = arith.constant 0 : index
    %c0_10 = arith.constant 0 : index
    %9 = vector.load %arg8[%c0_9, %c0_10] : memref<32x64xbf16, #tpu.memory_space<vmem>>, vector<32x64xbf16>
    %c0_11 = arith.constant 0 : index
    %c0_12 = arith.constant 0 : index
    %10 = vector.load %arg9[%c0_11, %c0_12] : memref<1x64xf32, #tpu.memory_space<vmem>>, vector<1x64xf32>
    %cst = arith.constant dense<0.000000e+00> : vector<16xf32>
    %11 = vector.multi_reduction <add>, %6, %cst [1] : vector<16x32xf32> to vector<16xf32>
    %12 = vector.shape_cast %11 : vector<16xf32> to vector<16x1xf32>
    %cst_13 = arith.constant 3.200000e+01 : f32
    %13 = vector.broadcast %cst_13 : f32 to vector<16x1xf32>
    %14 = arith.divf %12, %13 : vector<16x1xf32>
    %15 = vector.broadcast %14 : vector<16x1xf32> to vector<16x32xf32>
    %16 = arith.subf %6, %15 : vector<16x32xf32>
    %17 = arith.mulf %16, %16 : vector<16x32xf32>
    %cst_14 = arith.constant dense<0.000000e+00> : vector<16xf32>
    %18 = vector.multi_reduction <add>, %17, %cst_14 [1] : vector<16x32xf32> to vector<16xf32>
    %19 = vector.shape_cast %18 : vector<16xf32> to vector<16x1xf32>
    %cst_15 = arith.constant 3.200000e+01 : f32
    %20 = vector.broadcast %cst_15 : f32 to vector<16x1xf32>
    %21 = arith.divf %19, %20 : vector<16x1xf32>
    %22 = vector.broadcast %14 : vector<16x1xf32> to vector<16x32xf32>
    %23 = arith.subf %6, %22 : vector<16x32xf32>
    %cst_16 = arith.constant 9.99999974E-6 : f32
    %24 = vector.broadcast %cst_16 : f32 to vector<16x1xf32>
    %25 = arith.addf %21, %24 : vector<16x1xf32>
    %26 = math.rsqrt %25 : vector<16x1xf32>
    %27 = vector.broadcast %26 : vector<16x1xf32> to vector<16x32xf32>
    %28 = arith.mulf %23, %27 : vector<16x32xf32>
    %29 = vector.broadcast %7 : vector<1x32xf32> to vector<16x32xf32>
    %30 = arith.mulf %28, %29 : vector<16x32xf32>
    %31 = vector.broadcast %8 : vector<1x32xf32> to vector<16x32xf32>
    %32 = arith.addf %30, %31 : vector<16x32xf32>
    %cst_17 = arith.constant 1.750000e+00 : f32
    %33 = vector.broadcast %cst_17 : f32 to vector<16x32xf32>
    %34 = arith.mulf %32, %33 : vector<16x32xf32>
    %35 = arith.negf %6 : vector<16x32xf32>
    %36 = math.exp %35 : vector<16x32xf32>
    %cst_18 = arith.constant 1.000000e+00 : f32
    %37 = vector.broadcast %cst_18 : f32 to vector<16x32xf32>
    %38 = arith.addf %37, %36 : vector<16x32xf32>
    %39 = arith.divf %37, %38 : vector<16x32xf32>
    %40 = arith.mulf %6, %39 : vector<16x32xf32>
    %41 = arith.truncf %40 : vector<16x32xf32> to vector<16x32xbf16>
    %cst_19 = arith.constant dense<0.000000e+00> : vector<16x64xf32>
    %42 = tpu.matmul %41, %9, %cst_19 {dimension_numbers = #tpu.dot_dimension_numbers<[1], [0], [0], [1], [0, 0, 1, 1], [], []>} : vector<16x32xbf16>, vector<32x64xbf16>, vector<16x64xf32> -> vector<16x64xf32>
    %43 = vector.broadcast %10 : vector<1x64xf32> to vector<16x64xf32>
    %44 = arith.addf %42, %43 : vector<16x64xf32>
    %cst_20 = arith.constant -3.500000e+00 : f32
    %45 = vector.broadcast %cst_20 : f32 to vector<16x32xf32>
    %46 = arith.subf %34, %45 : vector<16x32xf32>
    %47 = arith.mulf %46, %46 : vector<16x32xf32>
    %cst_21 = arith.constant 0.000000e+00 : f32
    %48 = vector.broadcast %cst_21 : f32 to vector<16x32xf32>
    %49 = arith.subf %48, %47 : vector<16x32xf32>
    %50 = math.exp %49 : vector<16x32xf32>
    %51 = arith.truncf %50 : vector<16x32xf32> to vector<16x32xbf16>
    %c0_22 = arith.constant 0 : index
    %c0_23 = arith.constant 0 : index
    %c0_24 = arith.constant 0 : index
    %52 = vector.load %arg7[%c0_22, %c0_23, %c0_24] : memref<8x32x64xbf16, #tpu.memory_space<vmem>>, vector<1x32x64xbf16>
    %53 = vector.shape_cast %52 : vector<1x32x64xbf16> to vector<32x64xbf16>
    %cst_25 = arith.constant dense<0.000000e+00> : vector<16x64xf32>
    %54 = tpu.matmul %51, %53, %cst_25 {dimension_numbers = #tpu.dot_dimension_numbers<[1], [0], [0], [1], [0, 0, 1, 1], [], []>} : vector<16x32xbf16>, vector<32x64xbf16>, vector<16x64xf32> -> vector<16x64xf32>
    %55 = arith.addf %44, %54 : vector<16x64xf32>
    %cst_26 = arith.constant -2.500000e+00 : f32
    %56 = vector.broadcast %cst_26 : f32 to vector<16x32xf32>
    %57 = arith.subf %34, %56 : vector<16x32xf32>
    %58 = arith.mulf %57, %57 : vector<16x32xf32>
    %cst_27 = arith.constant 0.000000e+00 : f32
    %59 = vector.broadcast %cst_27 : f32 to vector<16x32xf32>
    %60 = arith.subf %59, %58 : vector<16x32xf32>
    %61 = math.exp %60 : vector<16x32xf32>
    %62 = arith.truncf %61 : vector<16x32xf32> to vector<16x32xbf16>
    %c1 = arith.constant 1 : index
    %c0_28 = arith.constant 0 : index
    %c0_29 = arith.constant 0 : index
    %63 = vector.load %arg7[%c1, %c0_28, %c0_29] : memref<8x32x64xbf16, #tpu.memory_space<vmem>>, vector<1x32x64xbf16>
    %64 = vector.shape_cast %63 : vector<1x32x64xbf16> to vector<32x64xbf16>
    %cst_30 = arith.constant dense<0.000000e+00> : vector<16x64xf32>
    %65 = tpu.matmul %62, %64, %cst_30 {dimension_numbers = #tpu.dot_dimension_numbers<[1], [0], [0], [1], [0, 0, 1, 1], [], []>} : vector<16x32xbf16>, vector<32x64xbf16>, vector<16x64xf32> -> vector<16x64xf32>
    %66 = arith.addf %55, %65 : vector<16x64xf32>
    %cst_31 = arith.constant -1.500000e+00 : f32
    %67 = vector.broadcast %cst_31 : f32 to vector<16x32xf32>
    %68 = arith.subf %34, %67 : vector<16x32xf32>
    %69 = arith.mulf %68, %68 : vector<16x32xf32>
    %cst_32 = arith.constant 0.000000e+00 : f32
    %70 = vector.broadcast %cst_32 : f32 to vector<16x32xf32>
    %71 = arith.subf %70, %69 : vector<16x32xf32>
    %72 = math.exp %71 : vector<16x32xf32>
    %73 = arith.truncf %72 : vector<16x32xf32> to vector<16x32xbf16>
    %c2 = arith.constant 2 : index
    %c0_33 = arith.constant 0 : index
    %c0_34 = arith.constant 0 : index
    %74 = vector.load %arg7[%c2, %c0_33, %c0_34] : memref<8x32x64xbf16, #tpu.memory_space<vmem>>, vector<1x32x64xbf16>
    %75 = vector.shape_cast %74 : vector<1x32x64xbf16> to vector<32x64xbf16>
    %cst_35 = arith.constant dense<0.000000e+00> : vector<16x64xf32>
    %76 = tpu.matmul %73, %75, %cst_35 {dimension_numbers = #tpu.dot_dimension_numbers<[1], [0], [0], [1], [0, 0, 1, 1], [], []>} : vector<16x32xbf16>, vector<32x64xbf16>, vector<16x64xf32> -> vector<16x64xf32>
    %77 = arith.addf %66, %76 : vector<16x64xf32>
    %cst_36 = arith.constant -5.000000e-01 : f32
    %78 = vector.broadcast %cst_36 : f32 to vector<16x32xf32>
    %79 = arith.subf %34, %78 : vector<16x32xf32>
    %80 = arith.mulf %79, %79 : vector<16x32xf32>
    %cst_37 = arith.constant 0.000000e+00 : f32
    %81 = vector.broadcast %cst_37 : f32 to vector<16x32xf32>
    %82 = arith.subf %81, %80 : vector<16x32xf32>
    %83 = math.exp %82 : vector<16x32xf32>
    %84 = arith.truncf %83 : vector<16x32xf32> to vector<16x32xbf16>
    %c3 = arith.constant 3 : index
    %c0_38 = arith.constant 0 : index
    %c0_39 = arith.constant 0 : index
    %85 = vector.load %arg7[%c3, %c0_38, %c0_39] : memref<8x32x64xbf16, #tpu.memory_space<vmem>>, vector<1x32x64xbf16>
    %86 = vector.shape_cast %85 : vector<1x32x64xbf16> to vector<32x64xbf16>
    %cst_40 = arith.constant dense<0.000000e+00> : vector<16x64xf32>
    %87 = tpu.matmul %84, %86, %cst_40 {dimension_numbers = #tpu.dot_dimension_numbers<[1], [0], [0], [1], [0, 0, 1, 1], [], []>} : vector<16x32xbf16>, vector<32x64xbf16>, vector<16x64xf32> -> vector<16x64xf32>
    %88 = arith.addf %77, %87 : vector<16x64xf32>
    %cst_41 = arith.constant 5.000000e-01 : f32
    %89 = vector.broadcast %cst_41 : f32 to vector<16x32xf32>
    %90 = arith.subf %34, %89 : vector<16x32xf32>
    %91 = arith.mulf %90, %90 : vector<16x32xf32>
    %cst_42 = arith.constant 0.000000e+00 : f32
    %92 = vector.broadcast %cst_42 : f32 to vector<16x32xf32>
    %93 = arith.subf %92, %91 : vector<16x32xf32>
    %94 = math.exp %93 : vector<16x32xf32>
    %95 = arith.truncf %94 : vector<16x32xf32> to vector<16x32xbf16>
    %c4 = arith.constant 4 : index
    %c0_43 = arith.constant 0 : index
    %c0_44 = arith.constant 0 : index
    %96 = vector.load %arg7[%c4, %c0_43, %c0_44] : memref<8x32x64xbf16, #tpu.memory_space<vmem>>, vector<1x32x64xbf16>
    %97 = vector.shape_cast %96 : vector<1x32x64xbf16> to vector<32x64xbf16>
    %cst_45 = arith.constant dense<0.000000e+00> : vector<16x64xf32>
    %98 = tpu.matmul %95, %97, %cst_45 {dimension_numbers = #tpu.dot_dimension_numbers<[1], [0], [0], [1], [0, 0, 1, 1], [], []>} : vector<16x32xbf16>, vector<32x64xbf16>, vector<16x64xf32> -> vector<16x64xf32>
    %99 = arith.addf %88, %98 : vector<16x64xf32>
    %cst_46 = arith.constant 1.500000e+00 : f32
    %100 = vector.broadcast %cst_46 : f32 to vector<16x32xf32>
    %101 = arith.subf %34, %100 : vector<16x32xf32>
    %102 = arith.mulf %101, %101 : vector<16x32xf32>
    %cst_47 = arith.constant 0.000000e+00 : f32
    %103 = vector.broadcast %cst_47 : f32 to vector<16x32xf32>
    %104 = arith.subf %103, %102 : vector<16x32xf32>
    %105 = math.exp %104 : vector<16x32xf32>
    %106 = arith.truncf %105 : vector<16x32xf32> to vector<16x32xbf16>
    %c5 = arith.constant 5 : index
    %c0_48 = arith.constant 0 : index
    %c0_49 = arith.constant 0 : index
    %107 = vector.load %arg7[%c5, %c0_48, %c0_49] : memref<8x32x64xbf16, #tpu.memory_space<vmem>>, vector<1x32x64xbf16>
    %108 = vector.shape_cast %107 : vector<1x32x64xbf16> to vector<32x64xbf16>
    %cst_50 = arith.constant dense<0.000000e+00> : vector<16x64xf32>
    %109 = tpu.matmul %106, %108, %cst_50 {dimension_numbers = #tpu.dot_dimension_numbers<[1], [0], [0], [1], [0, 0, 1, 1], [], []>} : vector<16x32xbf16>, vector<32x64xbf16>, vector<16x64xf32> -> vector<16x64xf32>
    %110 = arith.addf %99, %109 : vector<16x64xf32>
    %cst_51 = arith.constant 2.500000e+00 : f32
    %111 = vector.broadcast %cst_51 : f32 to vector<16x32xf32>
    %112 = arith.subf %34, %111 : vector<16x32xf32>
    %113 = arith.mulf %112, %112 : vector<16x32xf32>
    %cst_52 = arith.constant 0.000000e+00 : f32
    %114 = vector.broadcast %cst_52 : f32 to vector<16x32xf32>
    %115 = arith.subf %114, %113 : vector<16x32xf32>
    %116 = math.exp %115 : vector<16x32xf32>
    %117 = arith.truncf %116 : vector<16x32xf32> to vector<16x32xbf16>
    %c6 = arith.constant 6 : index
    %c0_53 = arith.constant 0 : index
    %c0_54 = arith.constant 0 : index
    %118 = vector.load %arg7[%c6, %c0_53, %c0_54] : memref<8x32x64xbf16, #tpu.memory_space<vmem>>, vector<1x32x64xbf16>
    %119 = vector.shape_cast %118 : vector<1x32x64xbf16> to vector<32x64xbf16>
    %cst_55 = arith.constant dense<0.000000e+00> : vector<16x64xf32>
    %120 = tpu.matmul %117, %119, %cst_55 {dimension_numbers = #tpu.dot_dimension_numbers<[1], [0], [0], [1], [0, 0, 1, 1], [], []>} : vector<16x32xbf16>, vector<32x64xbf16>, vector<16x64xf32> -> vector<16x64xf32>
    %121 = arith.addf %110, %120 : vector<16x64xf32>
    %cst_56 = arith.constant 3.500000e+00 : f32
    %122 = vector.broadcast %cst_56 : f32 to vector<16x32xf32>
    %123 = arith.subf %34, %122 : vector<16x32xf32>
    %124 = arith.mulf %123, %123 : vector<16x32xf32>
    %cst_57 = arith.constant 0.000000e+00 : f32
    %125 = vector.broadcast %cst_57 : f32 to vector<16x32xf32>
    %126 = arith.subf %125, %124 : vector<16x32xf32>
    %127 = math.exp %126 : vector<16x32xf32>
    %128 = arith.truncf %127 : vector<16x32xf32> to vector<16x32xbf16>
    %c7 = arith.constant 7 : index
    %c0_58 = arith.constant 0 : index
    %c0_59 = arith.constant 0 : index
    %129 = vector.load %arg7[%c7, %c0_58, %c0_59] : memref<8x32x64xbf16, #tpu.memory_space<vmem>>, vector<1x32x64xbf16>
    %130 = vector.shape_cast %129 : vector<1x32x64xbf16> to vector<32x64xbf16>
    %cst_60 = arith.constant dense<0.000000e+00> : vector<16x64xf32>
    %131 = tpu.matmul %128, %130, %cst_60 {dimension_numbers = #tpu.dot_dimension_numbers<[1], [0], [0], [1], [0, 0, 1, 1], [], []>} : vector<16x32xbf16>, vector<32x64xbf16>, vector<16x64xf32> -> vector<16x64xf32>
    %132 = arith.addf %121, %131 : vector<16x64xf32>
    %c0_61 = arith.constant 0 : index
    %c0_62 = arith.constant 0 : index
    %133 = vector.load %arg10[%c0_61, %c0_62] : memref<1x64xf32, #tpu.memory_space<vmem>>, vector<1x64xf32>
    %c0_63 = arith.constant 0 : index
    %c0_64 = arith.constant 0 : index
    %134 = vector.load %arg11[%c0_63, %c0_64] : memref<1x64xf32, #tpu.memory_space<vmem>>, vector<1x64xf32>
    %c0_65 = arith.constant 0 : index
    %c0_66 = arith.constant 0 : index
    %135 = vector.load %arg13[%c0_65, %c0_66] : memref<64x32xbf16, #tpu.memory_space<vmem>>, vector<64x32xbf16>
    %c0_67 = arith.constant 0 : index
    %c0_68 = arith.constant 0 : index
    %136 = vector.load %arg14[%c0_67, %c0_68] : memref<1x32xf32, #tpu.memory_space<vmem>>, vector<1x32xf32>
    %cst_69 = arith.constant dense<0.000000e+00> : vector<16xf32>
    %137 = vector.multi_reduction <add>, %132, %cst_69 [1] : vector<16x64xf32> to vector<16xf32>
    %138 = vector.shape_cast %137 : vector<16xf32> to vector<16x1xf32>
    %cst_70 = arith.constant 6.400000e+01 : f32
    %139 = vector.broadcast %cst_70 : f32 to vector<16x1xf32>
    %140 = arith.divf %138, %139 : vector<16x1xf32>
    %141 = vector.broadcast %140 : vector<16x1xf32> to vector<16x64xf32>
    %142 = arith.subf %132, %141 : vector<16x64xf32>
    %143 = arith.mulf %142, %142 : vector<16x64xf32>
    %cst_71 = arith.constant dense<0.000000e+00> : vector<16xf32>
    %144 = vector.multi_reduction <add>, %143, %cst_71 [1] : vector<16x64xf32> to vector<16xf32>
    %145 = vector.shape_cast %144 : vector<16xf32> to vector<16x1xf32>
    %cst_72 = arith.constant 6.400000e+01 : f32
    %146 = vector.broadcast %cst_72 : f32 to vector<16x1xf32>
    %147 = arith.divf %145, %146 : vector<16x1xf32>
    %148 = vector.broadcast %140 : vector<16x1xf32> to vector<16x64xf32>
    %149 = arith.subf %132, %148 : vector<16x64xf32>
    %cst_73 = arith.constant 9.99999974E-6 : f32
    %150 = vector.broadcast %cst_73 : f32 to vector<16x1xf32>
    %151 = arith.addf %147, %150 : vector<16x1xf32>
    %152 = math.rsqrt %151 : vector<16x1xf32>
    %153 = vector.broadcast %152 : vector<16x1xf32> to vector<16x64xf32>
    %154 = arith.mulf %149, %153 : vector<16x64xf32>
    %155 = vector.broadcast %133 : vector<1x64xf32> to vector<16x64xf32>
    %156 = arith.mulf %154, %155 : vector<16x64xf32>
    %157 = vector.broadcast %134 : vector<1x64xf32> to vector<16x64xf32>
    %158 = arith.addf %156, %157 : vector<16x64xf32>
    %cst_74 = arith.constant 1.750000e+00 : f32
    %159 = vector.broadcast %cst_74 : f32 to vector<16x64xf32>
    %160 = arith.mulf %158, %159 : vector<16x64xf32>
    %161 = arith.negf %132 : vector<16x64xf32>
    %162 = math.exp %161 : vector<16x64xf32>
    %cst_75 = arith.constant 1.000000e+00 : f32
    %163 = vector.broadcast %cst_75 : f32 to vector<16x64xf32>
    %164 = arith.addf %163, %162 : vector<16x64xf32>
    %165 = arith.divf %163, %164 : vector<16x64xf32>
    %166 = arith.mulf %132, %165 : vector<16x64xf32>
    %167 = arith.truncf %166 : vector<16x64xf32> to vector<16x64xbf16>
    %cst_76 = arith.constant dense<0.000000e+00> : vector<16x32xf32>
    %168 = tpu.matmul %167, %135, %cst_76 {dimension_numbers = #tpu.dot_dimension_numbers<[1], [0], [0], [1], [0, 0, 1, 1], [], []>} : vector<16x64xbf16>, vector<64x32xbf16>, vector<16x32xf32> -> vector<16x32xf32>
    %169 = vector.broadcast %136 : vector<1x32xf32> to vector<16x32xf32>
    %170 = arith.addf %168, %169 : vector<16x32xf32>
    %cst_77 = arith.constant -3.500000e+00 : f32
    %171 = vector.broadcast %cst_77 : f32 to vector<16x64xf32>
    %172 = arith.subf %160, %171 : vector<16x64xf32>
    %173 = arith.mulf %172, %172 : vector<16x64xf32>
    %cst_78 = arith.constant 0.000000e+00 : f32
    %174 = vector.broadcast %cst_78 : f32 to vector<16x64xf32>
    %175 = arith.subf %174, %173 : vector<16x64xf32>
    %176 = math.exp %175 : vector<16x64xf32>
    %177 = arith.truncf %176 : vector<16x64xf32> to vector<16x64xbf16>
    %c0_79 = arith.constant 0 : index
    %c0_80 = arith.constant 0 : index
    %c0_81 = arith.constant 0 : index
    %178 = vector.load %arg12[%c0_79, %c0_80, %c0_81] : memref<8x64x32xbf16, #tpu.memory_space<vmem>>, vector<1x64x32xbf16>
    %179 = vector.shape_cast %178 : vector<1x64x32xbf16> to vector<64x32xbf16>
    %cst_82 = arith.constant dense<0.000000e+00> : vector<16x32xf32>
    %180 = tpu.matmul %177, %179, %cst_82 {dimension_numbers = #tpu.dot_dimension_numbers<[1], [0], [0], [1], [0, 0, 1, 1], [], []>} : vector<16x64xbf16>, vector<64x32xbf16>, vector<16x32xf32> -> vector<16x32xf32>
    %181 = arith.addf %170, %180 : vector<16x32xf32>
    %cst_83 = arith.constant -2.500000e+00 : f32
    %182 = vector.broadcast %cst_83 : f32 to vector<16x64xf32>
    %183 = arith.subf %160, %182 : vector<16x64xf32>
    %184 = arith.mulf %183, %183 : vector<16x64xf32>
    %cst_84 = arith.constant 0.000000e+00 : f32
    %185 = vector.broadcast %cst_84 : f32 to vector<16x64xf32>
    %186 = arith.subf %185, %184 : vector<16x64xf32>
    %187 = math.exp %186 : vector<16x64xf32>
    %188 = arith.truncf %187 : vector<16x64xf32> to vector<16x64xbf16>
    %c1_85 = arith.constant 1 : index
    %c0_86 = arith.constant 0 : index
    %c0_87 = arith.constant 0 : index
    %189 = vector.load %arg12[%c1_85, %c0_86, %c0_87] : memref<8x64x32xbf16, #tpu.memory_space<vmem>>, vector<1x64x32xbf16>
    %190 = vector.shape_cast %189 : vector<1x64x32xbf16> to vector<64x32xbf16>
    %cst_88 = arith.constant dense<0.000000e+00> : vector<16x32xf32>
    %191 = tpu.matmul %188, %190, %cst_88 {dimension_numbers = #tpu.dot_dimension_numbers<[1], [0], [0], [1], [0, 0, 1, 1], [], []>} : vector<16x64xbf16>, vector<64x32xbf16>, vector<16x32xf32> -> vector<16x32xf32>
    %192 = arith.addf %181, %191 : vector<16x32xf32>
    %cst_89 = arith.constant -1.500000e+00 : f32
    %193 = vector.broadcast %cst_89 : f32 to vector<16x64xf32>
    %194 = arith.subf %160, %193 : vector<16x64xf32>
    %195 = arith.mulf %194, %194 : vector<16x64xf32>
    %cst_90 = arith.constant 0.000000e+00 : f32
    %196 = vector.broadcast %cst_90 : f32 to vector<16x64xf32>
    %197 = arith.subf %196, %195 : vector<16x64xf32>
    %198 = math.exp %197 : vector<16x64xf32>
    %199 = arith.truncf %198 : vector<16x64xf32> to vector<16x64xbf16>
    %c2_91 = arith.constant 2 : index
    %c0_92 = arith.constant 0 : index
    %c0_93 = arith.constant 0 : index
    %200 = vector.load %arg12[%c2_91, %c0_92, %c0_93] : memref<8x64x32xbf16, #tpu.memory_space<vmem>>, vector<1x64x32xbf16>
    %201 = vector.shape_cast %200 : vector<1x64x32xbf16> to vector<64x32xbf16>
    %cst_94 = arith.constant dense<0.000000e+00> : vector<16x32xf32>
    %202 = tpu.matmul %199, %201, %cst_94 {dimension_numbers = #tpu.dot_dimension_numbers<[1], [0], [0], [1], [0, 0, 1, 1], [], []>} : vector<16x64xbf16>, vector<64x32xbf16>, vector<16x32xf32> -> vector<16x32xf32>
    %203 = arith.addf %192, %202 : vector<16x32xf32>
    %cst_95 = arith.constant -5.000000e-01 : f32
    %204 = vector.broadcast %cst_95 : f32 to vector<16x64xf32>
    %205 = arith.subf %160, %204 : vector<16x64xf32>
    %206 = arith.mulf %205, %205 : vector<16x64xf32>
    %cst_96 = arith.constant 0.000000e+00 : f32
    %207 = vector.broadcast %cst_96 : f32 to vector<16x64xf32>
    %208 = arith.subf %207, %206 : vector<16x64xf32>
    %209 = math.exp %208 : vector<16x64xf32>
    %210 = arith.truncf %209 : vector<16x64xf32> to vector<16x64xbf16>
    %c3_97 = arith.constant 3 : index
    %c0_98 = arith.constant 0 : index
    %c0_99 = arith.constant 0 : index
    %211 = vector.load %arg12[%c3_97, %c0_98, %c0_99] : memref<8x64x32xbf16, #tpu.memory_space<vmem>>, vector<1x64x32xbf16>
    %212 = vector.shape_cast %211 : vector<1x64x32xbf16> to vector<64x32xbf16>
    %cst_100 = arith.constant dense<0.000000e+00> : vector<16x32xf32>
    %213 = tpu.matmul %210, %212, %cst_100 {dimension_numbers = #tpu.dot_dimension_numbers<[1], [0], [0], [1], [0, 0, 1, 1], [], []>} : vector<16x64xbf16>, vector<64x32xbf16>, vector<16x32xf32> -> vector<16x32xf32>
    %214 = arith.addf %203, %213 : vector<16x32xf32>
    %cst_101 = arith.constant 5.000000e-01 : f32
    %215 = vector.broadcast %cst_101 : f32 to vector<16x64xf32>
    %216 = arith.subf %160, %215 : vector<16x64xf32>
    %217 = arith.mulf %216, %216 : vector<16x64xf32>
    %cst_102 = arith.constant 0.000000e+00 : f32
    %218 = vector.broadcast %cst_102 : f32 to vector<16x64xf32>
    %219 = arith.subf %218, %217 : vector<16x64xf32>
    %220 = math.exp %219 : vector<16x64xf32>
    %221 = arith.truncf %220 : vector<16x64xf32> to vector<16x64xbf16>
    %c4_103 = arith.constant 4 : index
    %c0_104 = arith.constant 0 : index
    %c0_105 = arith.constant 0 : index
    %222 = vector.load %arg12[%c4_103, %c0_104, %c0_105] : memref<8x64x32xbf16, #tpu.memory_space<vmem>>, vector<1x64x32xbf16>
    %223 = vector.shape_cast %222 : vector<1x64x32xbf16> to vector<64x32xbf16>
    %cst_106 = arith.constant dense<0.000000e+00> : vector<16x32xf32>
    %224 = tpu.matmul %221, %223, %cst_106 {dimension_numbers = #tpu.dot_dimension_numbers<[1], [0], [0], [1], [0, 0, 1, 1], [], []>} : vector<16x64xbf16>, vector<64x32xbf16>, vector<16x32xf32> -> vector<16x32xf32>
    %225 = arith.addf %214, %224 : vector<16x32xf32>
    %cst_107 = arith.constant 1.500000e+00 : f32
    %226 = vector.broadcast %cst_107 : f32 to vector<16x64xf32>
    %227 = arith.subf %160, %226 : vector<16x64xf32>
    %228 = arith.mulf %227, %227 : vector<16x64xf32>
    %cst_108 = arith.constant 0.000000e+00 : f32
    %229 = vector.broadcast %cst_108 : f32 to vector<16x64xf32>
    %230 = arith.subf %229, %228 : vector<16x64xf32>
    %231 = math.exp %230 : vector<16x64xf32>
    %232 = arith.truncf %231 : vector<16x64xf32> to vector<16x64xbf16>
    %c5_109 = arith.constant 5 : index
    %c0_110 = arith.constant 0 : index
    %c0_111 = arith.constant 0 : index
    %233 = vector.load %arg12[%c5_109, %c0_110, %c0_111] : memref<8x64x32xbf16, #tpu.memory_space<vmem>>, vector<1x64x32xbf16>
    %234 = vector.shape_cast %233 : vector<1x64x32xbf16> to vector<64x32xbf16>
    %cst_112 = arith.constant dense<0.000000e+00> : vector<16x32xf32>
    %235 = tpu.matmul %232, %234, %cst_112 {dimension_numbers = #tpu.dot_dimension_numbers<[1], [0], [0], [1], [0, 0, 1, 1], [], []>} : vector<16x64xbf16>, vector<64x32xbf16>, vector<16x32xf32> -> vector<16x32xf32>
    %236 = arith.addf %225, %235 : vector<16x32xf32>
    %cst_113 = arith.constant 2.500000e+00 : f32
    %237 = vector.broadcast %cst_113 : f32 to vector<16x64xf32>
    %238 = arith.subf %160, %237 : vector<16x64xf32>
    %239 = arith.mulf %238, %238 : vector<16x64xf32>
    %cst_114 = arith.constant 0.000000e+00 : f32
    %240 = vector.broadcast %cst_114 : f32 to vector<16x64xf32>
    %241 = arith.subf %240, %239 : vector<16x64xf32>
    %242 = math.exp %241 : vector<16x64xf32>
    %243 = arith.truncf %242 : vector<16x64xf32> to vector<16x64xbf16>
    %c6_115 = arith.constant 6 : index
    %c0_116 = arith.constant 0 : index
    %c0_117 = arith.constant 0 : index
    %244 = vector.load %arg12[%c6_115, %c0_116, %c0_117] : memref<8x64x32xbf16, #tpu.memory_space<vmem>>, vector<1x64x32xbf16>
    %245 = vector.shape_cast %244 : vector<1x64x32xbf16> to vector<64x32xbf16>
    %cst_118 = arith.constant dense<0.000000e+00> : vector<16x32xf32>
    %246 = tpu.matmul %243, %245, %cst_118 {dimension_numbers = #tpu.dot_dimension_numbers<[1], [0], [0], [1], [0, 0, 1, 1], [], []>} : vector<16x64xbf16>, vector<64x32xbf16>, vector<16x32xf32> -> vector<16x32xf32>
    %247 = arith.addf %236, %246 : vector<16x32xf32>
    %cst_119 = arith.constant 3.500000e+00 : f32
    %248 = vector.broadcast %cst_119 : f32 to vector<16x64xf32>
    %249 = arith.subf %160, %248 : vector<16x64xf32>
    %250 = arith.mulf %249, %249 : vector<16x64xf32>
    %cst_120 = arith.constant 0.000000e+00 : f32
    %251 = vector.broadcast %cst_120 : f32 to vector<16x64xf32>
    %252 = arith.subf %251, %250 : vector<16x64xf32>
    %253 = math.exp %252 : vector<16x64xf32>
    %254 = arith.truncf %253 : vector<16x64xf32> to vector<16x64xbf16>
    %c7_121 = arith.constant 7 : index
    %c0_122 = arith.constant 0 : index
    %c0_123 = arith.constant 0 : index
    %255 = vector.load %arg12[%c7_121, %c0_122, %c0_123] : memref<8x64x32xbf16, #tpu.memory_space<vmem>>, vector<1x64x32xbf16>
    %256 = vector.shape_cast %255 : vector<1x64x32xbf16> to vector<64x32xbf16>
    %cst_124 = arith.constant dense<0.000000e+00> : vector<16x32xf32>
    %257 = tpu.matmul %254, %256, %cst_124 {dimension_numbers = #tpu.dot_dimension_numbers<[1], [0], [0], [1], [0, 0, 1, 1], [], []>} : vector<16x64xbf16>, vector<64x32xbf16>, vector<16x32xf32> -> vector<16x32xf32>
    %258 = arith.addf %247, %257 : vector<16x32xf32>
    %c0_125 = arith.constant 0 : index
    %c0_126 = arith.constant 0 : index
    %259 = vector.load %arg4[%c0_125, %c0_126] : memref<1x32xf32, #tpu.memory_space<vmem>>, vector<1x32xf32>
    %260 = vector.broadcast %259 : vector<1x32xf32> to vector<16x32xf32>
    %261 = arith.mulf %260, %258 : vector<16x32xf32>
    %262 = arith.addf %0, %261 : vector<16x32xf32>
    %c0_127 = arith.constant 0 : index
    %c0_128 = arith.constant 0 : index
    %263 = vector.load %arg15[%c0_127, %c0_128] : memref<16x32xf32, #tpu.memory_space<vmem>>, vector<16x32xf32>
    tpu.vector_store %arg15[%c0_127, %c0_128], %262 {strides = array<i32>} : memref<16x32xf32, #tpu.memory_space<vmem>>, vector<16x32xf32>,
    return
  }
  func.func @transform_0(%arg0: i32) -> (i32, i32) {
    %c0_i32 = arith.constant 0 : i32
    %c0_i32_0 = arith.constant 0 : i32
    return %arg0, %c0_i32 : i32, i32
  }
  func.func @transform_1(%arg0: i32) -> (i32, i32) {
    %c0_i32 = arith.constant 0 : i32
    %c0_i32_0 = arith.constant 0 : i32
    %c0_i32_1 = arith.constant 0 : i32
    return %c0_i32, %c0_i32_0 : i32, i32
  }
  func.func @transform_2(%arg0: i32) -> (i32, i32) {
    %c0_i32 = arith.constant 0 : i32
    %c0_i32_0 = arith.constant 0 : i32
    %c0_i32_1 = arith.constant 0 : i32
    return %c0_i32, %c0_i32_0 : i32, i32
  }
  func.func @transform_3(%arg0: i32) -> (i32, i32) {
    %c0_i32 = arith.constant 0 : i32
    %c0_i32_0 = arith.constant 0 : i32
    %c0_i32_1 = arith.constant 0 : i32
    return %c0_i32, %c0_i32_0 : i32, i32
  }
  func.func @transform_4(%arg0: i32) -> (i32, i32) {
    %c0_i32 = arith.constant 0 : i32
    %c0_i32_0 = arith.constant 0 : i32
    %c0_i32_1 = arith.constant 0 : i32
    return %c0_i32, %c0_i32_0 : i32, i32
  }
  func.func @transform_5(%arg0: i32) -> (i32, i32) {
    %c0_i32 = arith.constant 0 : i32
    %c0_i32_0 = arith.constant 0 : i32
    %c0_i32_1 = arith.constant 0 : i32
    return %c0_i32, %c0_i32_0 : i32, i32
  }
  func.func @transform_6(%arg0: i32) -> (i32, i32, i32) {
    %c0_i32 = arith.constant 0 : i32
    %c0_i32_0 = arith.constant 0 : i32
    %c0_i32_1 = arith.constant 0 : i32
    %c0_i32_2 = arith.constant 0 : i32
    return %c0_i32, %c0_i32_0, %c0_i32_1 : i32, i32, i32
  }
  func.func @transform_7(%arg0: i32) -> (i32, i32) {
    %c0_i32 = arith.constant 0 : i32
    %c0_i32_0 = arith.constant 0 : i32
    %c0_i32_1 = arith.constant 0 : i32
    return %c0_i32, %c0_i32_0 : i32, i32
  }
  func.func @transform_8(%arg0: i32) -> (i32, i32) {
    %c0_i32 = arith.constant 0 : i32
    %c0_i32_0 = arith.constant 0 : i32
    %c0_i32_1 = arith.constant 0 : i32
    return %c0_i32, %c0_i32_0 : i32, i32
  }
  func.func @transform_9(%arg0: i32) -> (i32, i32) {
    %c0_i32 = arith.constant 0 : i32
    %c0_i32_0 = arith.constant 0 : i32
    %c0_i32_1 = arith.constant 0 : i32
    return %c0_i32, %c0_i32_0 : i32, i32
  }
  func.func @transform_10(%arg0: i32) -> (i32, i32) {
    %c0_i32 = arith.constant 0 : i32
    %c0_i32_0 = arith.constant 0 : i32
    %c0_i32_1 = arith.constant 0 : i32
    return %c0_i32, %c0_i32_0 : i32, i32
  }
  func.func @transform_11(%arg0: i32) -> (i32, i32, i32) {
    %c0_i32 = arith.constant 0 : i32
    %c0_i32_0 = arith.constant 0 : i32
    %c0_i32_1 = arith.constant 0 : i32
    %c0_i32_2 = arith.constant 0 : i32
    return %c0_i32, %c0_i32_0, %c0_i32_1 : i32, i32, i32
  }
  func.func @transform_12(%arg0: i32) -> (i32, i32) {
    %c0_i32 = arith.constant 0 : i32
    %c0_i32_0 = arith.constant 0 : i32
    %c0_i32_1 = arith.constant 0 : i32
    return %c0_i32, %c0_i32_0 : i32, i32
  }
  func.func @transform_13(%arg0: i32) -> (i32, i32) {
    %c0_i32 = arith.constant 0 : i32
    %c0_i32_0 = arith.constant 0 : i32
    %c0_i32_1 = arith.constant 0 : i32
    return %c0_i32, %c0_i32_0 : i32, i32
  }
  func.func @transform_14(%arg0: i32) -> (i32, i32) {
    %c0_i32 = arith.constant 0 : i32
    %c0_i32_0 = arith.constant 0 : i32
    return %arg0, %c0_i32 : i32, i32
  }
}

</mosaic_0001>

<llo_original>
// kernel: reskan_block.2
$region0: #{reskan_block.2}
  #allocation0 [shape = 'u32[]', space=smem, size = 0x4, offset = 0x4, fixed_abs, tag = 'smem constant byte address 0x4 - core index']
  #allocation1 [shape = 'u32[72,128]{1,0:T(1,128)}', space=vmem, size = 0x9000, scoped, tag = 'internal scratch']
  %s0 = inlined_call_operand.hbm [shape: f32[2,8,32], index: 0, kind: input, shape index: {}]
  %s1 = inlined_call_operand.vmem [shape: f32[1,32], index: 1, kind: input, shape index: {}]
  %s2 = inlined_call_operand.vmem [shape: f32[1,32], index: 2, kind: input, shape index: {}]
  %s3 = inlined_call_operand.vmem [shape: f32[1,32], index: 3, kind: input, shape index: {}]
  %s4 = inlined_call_operand.vmem [shape: f32[8,1], index: 4, kind: input, shape index: {}]
  %s5 = inlined_call_operand.vmem [shape: f32[8,1], index: 5, kind: input, shape index: {}]
  %s6 = inlined_call_operand.hbm [shape: bf16[8,8,8], index: 6, kind: input, shape index: {}]
  %s7 = inlined_call_operand.vmem [shape: bf16[8,8], index: 7, kind: input, shape index: {}]
  %s8 = inlined_call_operand.vmem [shape: f32[8,1], index: 8, kind: input, shape index: {}]
  %s9 = inlined_call_operand.vmem [shape: f32[2,8,32], index: 9, kind: output, shape index: {}]
  %s10 = sld [smem:[#allocation0]]
  $region77: #{reskan_block.2} parent=0
    _
  %s12 = ssub.s32 1, %s10
  %s13 = scalar_select 0, %s12, %s10
  $region1: #{reskan_block.2} parent=0
    #allocation2 [shape = 'u8[8192]{0}', space=vmem, size = 0x2000, scoped, tag = 'input window, operand 0']
    #allocation3 [shape = 's32[2]{0}', space=sflag, size = 0x8, scoped, tag = 'scoped memory for reskan_block.2']
    #allocation4 [shape = 'u8[16384]{0}', space=vmem, size = 0x4000, scoped, tag = 'input window, operand 6, single buffered']
    #allocation5 [shape = 's32[1]{0}', space=sflag, size = 0x4, scoped, tag = 'scoped memory for reskan_block.2']
    %14 = vsyncpa [#allocation3], 0
    %s15 = scalar_lea.sflag [#allocation3], 1
    %16 = vsyncpa %s15, 0
    %17 = vsyncpa [#allocation5], 0
    loop: start=0, step=1, limit=4
    $region2: #{reskan_block.2} parent=1 // loop_pre_header
      _
    $region3: #{reskan_block.2} parent=1 // loop_header
      %s19 = sphi 0, %s23
      %p20 = scmp.ge.s32.totalorder %s19, 4
      %s26 = sphi 0, %s38
      %s27 = sphi 0, %s34
      %s28 = sphi 0, %s26
      %s29 = sphi 0, %s27
      %s30 = sphi 0, %s28
      %s31 = sphi 0, %s29
      %s43 = sphi 0, %s45
      %s46 = sphi 0, %s43
      %s47 = sphi 0, %s46
      %s63 = sphi 0, %s47
      %s69 = sphi 0, %s71
      %s72 = sphi 0, %s69
      %s73 = sphi 0, %s72
      %s89 = sphi 0, %s73
      %s95 = sphi 0, %s97
      %s98 = sphi 0, %s95
      %s99 = sphi 0, %s98
      %s115 = sphi 0, %s99
      %s121 = sphi 0, %s123
      %s124 = sphi 0, %s121
      %s125 = sphi 0, %s124
      %s141 = sphi 0, %s125
      %s145 = sphi 0, %s145
      %s147 = sphi 0, %s145
      %s148 = sphi 0, %s147
      %s162 = sphi 0, %s148
      %s166 = sphi 0, %s166
      %s168 = sphi 0, %s166
      %s169 = sphi 0, %s168
      %s183 = sphi 0, %s169
      %s187 = sphi 0, %s187
      %s189 = sphi 0, %s187
      %s190 = sphi 0, %s189
      %s204 = sphi 0, %s190
      %s208 = sphi 0, %s208
      %s210 = sphi 0, %s208
      %s211 = sphi 0, %s210
      %s225 = sphi 0, %s211
      %s229 = sphi 0, %s229
      %s231 = sphi 0, %s229
      %s232 = sphi 0, %s231
      %s246 = sphi 0, %s232
      %s254 = sphi 0, %s256
      %s257 = sphi 0, %s254
      %s258 = sphi 0, %s257
      %s274 = sphi 0, %s258
    $region4: #{reskan_block.2} parent=1 // loop_header_branch
      %22 = sbr.rel (%p20) target = $region8
    $region5: #{reskan_block.2} parent=1 // loop_body
      %s24 = ssub.s32 %s19, 1
      %s25 = ssub.s32 %s19, 2
      %s32 = sadd.s32 1, %s27
      %p33 = scmp.ge.s32.totalorder %s32, 1
      %s34 = scalar_select %p33, 0, %s32
      %s35 = sadd.s32 1, %s26
      %s36 = scalar_select %p33, %s35, %s26
      %p37 = scmp.ge.s32.totalorder %s36, 2
      %s38 = scalar_select %p37, 0, %s36
      %s39 = ssub.s32 %s26, %s38
      %s40 = ssub.s32 %s27, %s34
      %s41 = sor.u32 %s39, %s40
      %p42 = scmp.eq.s32.totalorder %s41, 0
      %s44 = sadd.s32 %s43, 1
      %s45 = scalar_select %p42, %s43, %s44
      %p48 = pneg %p42
      %p49 = scmp.eq.s32.totalorder %s19, 1
      %p50 = por %p48, %p49
      %p51 = scmp.ne.s32.totalorder %s43, %s46
      %p52 = scmp.eq.s32.totalorder %s19, 0
      %p53 = por %p51, %p52
      %p54 = scmp.ne.s32.totalorder %s43, %s46
      %p55 = scmp.eq.s32.totalorder %s24, 1
      %p56 = por %p54, %p55
      %p57 = scmp.ne.s32.totalorder %s46, %s47
      %p58 = scmp.eq.s32.totalorder %s24, 0
      %p59 = por %p57, %p58
      %p60 = scmp.ne.s32.totalorder %s46, %s47
      %p61 = scmp.eq.s32.totalorder %s25, 1
      %p62 = por %p60, %p61
      %p64 = scmp.ne.s32.totalorder %s47, %s63
      %p65 = scmp.eq.s32.totalorder %s25, 0
      %p66 = por %p64, %p65
      %s67 = ssub.s32 %s27, %s34
      %p68 = scmp.eq.s32.totalorder %s67, 0
      %s70 = sadd.s32 %s69, 1
      %s71 = scalar_select %p68, %s69, %s70
      %p74 = pneg %p68
      %p75 = scmp.eq.s32.totalorder %s19, 1
      %p76 = por %p74, %p75
      %p77 = scmp.ne.s32.totalorder %s69, %s72
      %p78 = scmp.eq.s32.totalorder %s19, 0
      %p79 = por %p77, %p78
      %p80 = scmp.ne.s32.totalorder %s69, %s72
      %p81 = scmp.eq.s32.totalorder %s24, 1
      %p82 = por %p80, %p81
      %p83 = scmp.ne.s32.totalorder %s72, %s73
      %p84 = scmp.eq.s32.totalorder %s24, 0
      %p85 = por %p83, %p84
      %p86 = scmp.ne.s32.totalorder %s72, %s73
      %p87 = scmp.eq.s32.totalorder %s25, 1
      %p88 = por %p86, %p87
      %p90 = scmp.ne.s32.totalorder %s73, %s89
      %p91 = scmp.eq.s32.totalorder %s25, 0
      %p92 = por %p90, %p91
      %s93 = ssub.s32 %s27, %s34
      %p94 = scmp.eq.s32.totalorder %s93, 0
      %s96 = sadd.s32 %s95, 1
      %s97 = scalar_select %p94, %s95, %s96
      %p100 = pneg %p94
      %p101 = scmp.eq.s32.totalorder %s19, 1
      %p102 = por %p100, %p101
      %p103 = scmp.ne.s32.totalorder %s95, %s98
      %p104 = scmp.eq.s32.totalorder %s19, 0
      %p105 = por %p103, %p104
      %p106 = scmp.ne.s32.totalorder %s95, %s98
      %p107 = scmp.eq.s32.totalorder %s24, 1
      %p108 = por %p106, %p107
      %p109 = scmp.ne.s32.totalorder %s98, %s99
      %p110 = scmp.eq.s32.totalorder %s24, 0
      %p111 = por %p109, %p110
      %p112 = scmp.ne.s32.totalorder %s98, %s99
      %p113 = scmp.eq.s32.totalorder %s25, 1
      %p114 = por %p112, %p113
      %p116 = scmp.ne.s32.totalorder %s99, %s115
      %p117 = scmp.eq.s32.totalorder %s25, 0
      %p118 = por %p116, %p117
      %s119 = ssub.s32 %s27, %s34
      %p120 = scmp.eq.s32.totalorder %s119, 0
      %s122 = sadd.s32 %s121, 1
      %s123 = scalar_select %p120, %s121, %s122
      %p126 = pneg %p120
      %p127 = scmp.eq.s32.totalorder %s19, 1
      %p128 = por %p126, %p127
      %p129 = scmp.ne.s32.totalorder %s121, %s124
      %p130 = scmp.eq.s32.totalorder %s19, 0
      %p131 = por %p129, %p130
      %p132 = scmp.ne.s32.totalorder %s121, %s124
      %p133 = scmp.eq.s32.totalorder %s24, 1
      %p134 = por %p132, %p133
      %p135 = scmp.ne.s32.totalorder %s124, %s125
      %p136 = scmp.eq.s32.totalorder %s24, 0
      %p137 = por %p135, %p136
      %p138 = scmp.ne.s32.totalorder %s124, %s125
      %p139 = scmp.eq.s32.totalorder %s25, 1
      %p140 = por %p138, %p139
      %p142 = scmp.ne.s32.totalorder %s125, %s141
      %p143 = scmp.eq.s32.totalorder %s25, 0
      %p144 = por %p142, %p143
      %s146 = sadd.s32 %s145, 1
      %p149 = scmp.eq.s32.totalorder %s19, 1
      %p150 = scmp.ne.s32.totalorder %s145, %s147
      %p151 = scmp.eq.s32.totalorder %s19, 0
      %p152 = por %p150, %p151
      %p153 = scmp.ne.s32.totalorder %s145, %s147
      %p154 = scmp.eq.s32.totalorder %s24, 1
      %p155 = por %p153, %p154
      %p156 = scmp.ne.s32.totalorder %s147, %s148
      %p157 = scmp.eq.s32.totalorder %s24, 0
      %p158 = por %p156, %p157
      %p159 = scmp.ne.s32.totalorder %s147, %s148
      %p160 = scmp.eq.s32.totalorder %s25, 1
      %p161 = por %p159, %p160
      %p163 = scmp.ne.s32.totalorder %s148, %s162
      %p164 = scmp.eq.s32.totalorder %s25, 0
      %p165 = por %p163, %p164
      %s167 = sadd.s32 %s166, 1
      %p170 = scmp.eq.s32.totalorder %s19, 1
      %p171 = scmp.ne.s32.totalorder %s166, %s168
      %p172 = scmp.eq.s32.totalorder %s19, 0
      %p173 = por %p171, %p172
      %p174 = scmp.ne.s32.totalorder %s166, %s168
      %p175 = scmp.eq.s32.totalorder %s24, 1
      %p176 = por %p174, %p175
      %p177 = scmp.ne.s32.totalorder %s168, %s169
      %p178 = scmp.eq.s32.totalorder %s24, 0
      %p179 = por %p177, %p178
      %p180 = scmp.ne.s32.totalorder %s168, %s169
      %p181 = scmp.eq.s32.totalorder %s25, 1
      %p182 = por %p180, %p181
      %p184 = scmp.ne.s32.totalorder %s169, %s183
      %p185 = scmp.eq.s32.totalorder %s25, 0
      %p186 = por %p184, %p185
      %s188 = sadd.s32 %s187, 1
      %p191 = scmp.eq.s32.totalorder %s19, 1
      %p192 = scmp.ne.s32.totalorder %s187, %s189
      %p193 = scmp.eq.s32.totalorder %s19, 0
      %p194 = por %p192, %p193
      %p195 = scmp.ne.s32.totalorder %s187, %s189
      %p196 = scmp.eq.s32.totalorder %s24, 1
      %p197 = por %p195, %p196
      %p198 = scmp.ne.s32.totalorder %s189, %s190
      %p199 = scmp.eq.s32.totalorder %s24, 0
      %p200 = por %p198, %p199
      %p201 = scmp.ne.s32.totalorder %s189, %s190
      %p202 = scmp.eq.s32.totalorder %s25, 1
      %p203 = por %p201, %p202
      %p205 = scmp.ne.s32.totalorder %s190, %s204
      %p206 = scmp.eq.s32.totalorder %s25, 0
      %p207 = por %p205, %p206
      %s209 = sadd.s32 %s208, 1
      %p212 = scmp.eq.s32.totalorder %s19, 1
      %p213 = scmp.ne.s32.totalorder %s208, %s210
      %p214 = scmp.eq.s32.totalorder %s19, 0
      %p215 = por %p213, %p214
      %p216 = scmp.ne.s32.totalorder %s208, %s210
      %p217 = scmp.eq.s32.totalorder %s24, 1
      %p218 = por %p216, %p217
      %p219 = scmp.ne.s32.totalorder %s210, %s211
      %p220 = scmp.eq.s32.totalorder %s24, 0
      %p221 = por %p219, %p220
      %p222 = scmp.ne.s32.totalorder %s210, %s211
      %p223 = scmp.eq.s32.totalorder %s25, 1
      %p224 = por %p222, %p223
      %p226 = scmp.ne.s32.totalorder %s211, %s225
      %p227 = scmp.eq.s32.totalorder %s25, 0
      %p228 = por %p226, %p227
      %s230 = sadd.s32 %s229, 1
      %p233 = scmp.eq.s32.totalorder %s19, 1
      %p234 = scmp.ne.s32.totalorder %s229, %s231
      %p235 = scmp.eq.s32.totalorder %s19, 0
      %p236 = por %p234, %p235
      %p237 = scmp.ne.s32.totalorder %s229, %s231
      %p238 = scmp.eq.s32.totalorder %s24, 1
      %p239 = por %p237, %p238
      %p240 = scmp.ne.s32.totalorder %s231, %s232
      %p241 = scmp.eq.s32.totalorder %s24, 0
      %p242 = por %p240, %p241
      %p243 = scmp.ne.s32.totalorder %s231, %s232
      %p244 = scmp.eq.s32.totalorder %s25, 1
      %p245 = por %p243, %p244
      %p247 = scmp.ne.s32.totalorder %s232, %s246
      %p248 = scmp.eq.s32.totalorder %s25, 0
      %p249 = por %p247, %p248
      %s250 = ssub.s32 %s26, %s38
      %s251 = ssub.s32 %s27, %s34
      %s252 = sor.u32 %s250, %s251
      %p253 = scmp.eq.s32.totalorder %s252, 0
      %s255 = sadd.s32 %s254, 1
      %s256 = scalar_select %p253, %s254, %s255
      %p259 = pneg %p253
      %p260 = scmp.eq.s32.totalorder %s19, 1
      %p261 = por %p259, %p260
      %p262 = scmp.ne.s32.totalorder %s254, %s257
      %p263 = scmp.eq.s32.totalorder %s19, 0
      %p264 = por %p262, %p263
      %p265 = scmp.ne.s32.totalorder %s254, %s257
      %p266 = scmp.eq.s32.totalorder %s24, 1
      %p267 = por %p265, %p266
      %p268 = scmp.ne.s32.totalorder %s257, %s258
      %p269 = scmp.eq.s32.totalorder %s24, 0
      %p270 = por %p268, %p269
      %p271 = scmp.ne.s32.totalorder %s257, %s258
      %p272 = scmp.eq.s32.totalorder %s25, 1
      %p273 = por %p271, %p272
      %p275 = scmp.ne.s32.totalorder %s258, %s274
      %p276 = scmp.eq.s32.totalorder %s25, 0
      %p277 = por %p275, %p276
      %p278 = scmp.le.s32.totalorder 1, %s19
      %p279 = scmp.lt.s32.totalorder %s19, 3
      %p280 = pnand %p278, %p279
      %p281 = pneg %p280
      // Predicated region
      $region9: #{reskan_block.2} parent=5 // pred_check
        _
      $region10: #{reskan_block.2} parent=5 // pred_check_branch
        %283 = sbr.rel (%p280) target = $region12
      $region11: #{reskan_block.2} parent=5 // pred_region
        %s284 = ssub.s32 %s19, 1
        // Predicated region
        $region13: #{reskan_block.2} parent=11 // pred_check
          %p285 = pneg %p85
        $region14: #{reskan_block.2} parent=11 // pred_check_branch
          %287 = sbr.rel (%p285) target = $region16
        $region15: #{reskan_block.2} parent=11 // pred_region
          %p288 = scmp.lt.s32.totalorder %s29, 0
          %s289 = scalar_select %p288, %s29, 0
          %s290 = scalar_lea.vmem %s1, %s289
        $region16: #{reskan_block.2} parent=11 // pred_fallthru
          _
        // Predicated region
        $region17: #{reskan_block.2} parent=11 // pred_check
          %p291 = pneg %p111
        $region18: #{reskan_block.2} parent=11 // pred_check_branch
          %293 = sbr.rel (%p291) target = $region20
        $region19: #{reskan_block.2} parent=11 // pred_region
          %p294 = scmp.lt.s32.totalorder %s29, 0
          %s295 = scalar_select %p294, %s29, 0
          %s296 = scalar_lea.vmem %s2, %s295
        $region20: #{reskan_block.2} parent=11 // pred_fallthru
          _
        // Predicated region
        $region21: #{reskan_block.2} parent=11 // pred_check
          %p297 = pneg %p137
        $region22: #{reskan_block.2} parent=11 // pred_check_branch
          %299 = sbr.rel (%p297) target = $region24
        $region23: #{reskan_block.2} parent=11 // pred_region
          %p300 = scmp.lt.s32.totalorder %s29, 0
          %s301 = scalar_select %p300, %s29, 0
          %s302 = scalar_lea.vmem %s3, %s301
        $region24: #{reskan_block.2} parent=11 // pred_fallthru
          _
        // Predicated region
        $region25: #{reskan_block.2} parent=11 // pred_check
          %p303 = pneg %p158
        $region26: #{reskan_block.2} parent=11 // pred_check_branch
          %305 = sbr.rel (%p303) target = $region28
        $region27: #{reskan_block.2} parent=11 // pred_region
          _
        $region28: #{reskan_block.2} parent=11 // pred_fallthru
          _
        // Predicated region
        $region29: #{reskan_block.2} parent=11 // pred_check
          %p306 = pneg %p179
        $region30: #{reskan_block.2} parent=11 // pred_check_branch
          %308 = sbr.rel (%p306) target = $region32
        $region31: #{reskan_block.2} parent=11 // pred_region
          _
        $region32: #{reskan_block.2} parent=11 // pred_fallthru
          _
        // Predicated region
        $region33: #{reskan_block.2} parent=11 // pred_check
          %p309 = pneg %p200
        $region34: #{reskan_block.2} parent=11 // pred_check_branch
          %311 = sbr.rel (%p309) target = $region36
        $region35: #{reskan_block.2} parent=11 // pred_region
          %313 = vsyncadd [#allocation5], 0
          %s314 = sshll.u32 %s6, 4
          %s315 = int_to_ptr.hbm [resolvable:$true] %s314
          %s316 = sshll.u32 [#allocation4], 4
          %s317 = int_to_ptr.vmem [resolvable:$true] %s316
          %322 = dma.hbm_to_vmem [thread:$0]  %s315, 512, %s317, [#allocation5], 64, 64, 4
        $region36: #{reskan_block.2} parent=11 // pred_fallthru
          _
        // Predicated region
        $region37: #{reskan_block.2} parent=11 // pred_check
          %p323 = pneg %p221
        $region38: #{reskan_block.2} parent=11 // pred_check_branch
          %325 = sbr.rel (%p323) target = $region40
        $region39: #{reskan_block.2} parent=11 // pred_region
          _
        $region40: #{reskan_block.2} parent=11 // pred_fallthru
          _
        // Predicated region
        $region41: #{reskan_block.2} parent=11 // pred_check
          %p326 = pneg %p242
        $region42: #{reskan_block.2} parent=11 // pred_check_branch
          %328 = sbr.rel (%p326) target = $region44
        $region43: #{reskan_block.2} parent=11 // pred_region
          _
        $region44: #{reskan_block.2} parent=11 // pred_fallthru
          _
      $region12: #{reskan_block.2} parent=5 // pred_fallthru
        _
      %p329 = scmp.lt.s32.totalorder %s19, 2
      // Predicated region
      $region45: #{reskan_block.2} parent=5 // pred_check
        %p330 = pneg %p329
      $region46: #{reskan_block.2} parent=5 // pred_check_branch
        %332 = sbr.rel (%p330) target = $region48
      $region47: #{reskan_block.2} parent=5 // pred_region
        // Predicated region
        $region49: #{reskan_block.2} parent=47 // pred_check
          %p333 = pneg %p53
        $region50: #{reskan_block.2} parent=47 // pred_check_branch
          %335 = sbr.rel (%p333) target = $region52
        $region51: #{reskan_block.2} parent=47 // pred_region
          %s336 = sand.u32 %s43, 1
          %s337 = scalar_lea.sflag [#allocation3], %s336
          %s338 = sand.u32 %s43, 1
          %s339 = smul.addr %s338, 8
          %s340 = scalar_lea.vmem [#allocation2], %s339
          %342 = vsyncadd %s337, 0
          %s343 = sadd.s32 %s27, %s26
          %s344 = smul.addr %s343, 8
          %s345 = scalar_lea.hbm %s0, %s344
          %s347 = sshll.u32 %s345, 4
          %s348 = int_to_ptr.hbm [resolvable:$true] %s347
          %s349 = sshll.u32 %s340, 4
          %s350 = int_to_ptr.vmem [resolvable:$true] %s349
          %352 = dma.hbm_to_vmem [thread:$0]  %s348, 128, %s350, %s337
        $region52: #{reskan_block.2} parent=47 // pred_fallthru
          _
      $region48: #{reskan_block.2} parent=5 // pred_fallthru
        _
      %p353 = scmp.le.s32.totalorder 1, %s19
      %p354 = scmp.lt.s32.totalorder %s19, 3
      %p355 = pnand %p353, %p354
      %p356 = pneg %p355
      // Predicated region
      $region53: #{reskan_block.2} parent=5 // pred_check
        _
      $region54: #{reskan_block.2} parent=5 // pred_check_branch
        %358 = sbr.rel (%p355) target = $region56
      $region55: #{reskan_block.2} parent=5 // pred_region
        %s359 = ssub.s32 %s19, 1
        %s360 = sand.u32 %s46, 1
        %s361 = scalar_lea.sflag [#allocation3], %s360
        %s362 = sand.u32 %s46, 1
        %s363 = smul.addr %s362, 8
        %s364 = scalar_lea.vmem [#allocation2], %s363
        // Predicated region
        $region57: #{reskan_block.2} parent=55 // pred_check
          %p365 = pneg %p59
        $region58: #{reskan_block.2} parent=55 // pred_check_branch
          %367 = sbr.rel (%p365) target = $region60
        $region59: #{reskan_block.2} parent=55 // pred_region
          %369 = dma.done %s361, 128
        $region60: #{reskan_block.2} parent=55 // pred_fallthru
          _
        // Predicated region
        $region61: #{reskan_block.2} parent=55 // pred_check
          %p370 = pneg %p200
        $region62: #{reskan_block.2} parent=55 // pred_check_branch
          %372 = sbr.rel (%p370) target = $region64
        $region63: #{reskan_block.2} parent=55 // pred_region
          %374 = dma.done [#allocation5], 512
        $region64: #{reskan_block.2} parent=55 // pred_fallthru
          _
        %s375 = sand.u32 %s46, 1
        %s376 = scalar_lea.sflag [#allocation3], %s375
        %s377 = sand.u32 %s46, 1
        %s378 = smul.addr %s377, 8
        %s379 = scalar_lea.vmem [#allocation2], %s378
        %p380 = pneg %p59
        %p381 = pneg %p56
        %p382 = scmp.lt.s32.totalorder %s29, 0
        %s383 = scalar_select %p382, %s29, 0
        %s384 = scalar_lea.vmem %s1, %s383
        %p385 = pneg %p85
        %p386 = pneg %p82
        %p387 = scmp.lt.s32.totalorder %s29, 0
        %s388 = scalar_select %p387, %s29, 0
        %s389 = scalar_lea.vmem %s2, %s388
        %p390 = pneg %p111
        %p391 = pneg %p108
        %p392 = scmp.lt.s32.totalorder %s29, 0
        %s393 = scalar_select %p392, %s29, 0
        %s394 = scalar_lea.vmem %s3, %s393
        %p395 = pneg %p137
        %p396 = pneg %p134
        %p397 = pneg %p158
        %p398 = pneg %p155
        %p399 = pneg %p179
        %p400 = pneg %p176
        %p401 = pneg %p200
        %p402 = pneg %p197
        %p403 = pneg %p221
        %p404 = pneg %p218
        %p405 = pneg %p242
        %p406 = pneg %p239
        %p407 = pneg %p270
        %p408 = pneg %p267
        %p409 = scmp.lt.s32.totalorder %s28, 1
        %s410 = scalar_select %p409, %s28, 1
        %p411 = scmp.lt.s32.totalorder %s29, 0
        %s412 = scalar_select %p411, %s29, 0
        %s413 = sadd.s32 %s412, %s410
        %s414 = smul.addr %s413, 8
        %s415 = scalar_lea.vmem %s9, %s414
        %p416 = scmp.lt.s32.totalorder %s29, 0
        %s417 = scalar_select %p416, %s29, 0
        %s418 = scalar_lea.vmem %s1, %s417
        %p419 = scmp.lt.s32.totalorder %s29, 0
        %s420 = scalar_select %p419, %s29, 0
        %s421 = scalar_lea.vmem %s2, %s420
        %p422 = scmp.lt.s32.totalorder %s29, 0
        %s423 = scalar_select %p422, %s29, 0
        %s424 = scalar_lea.vmem %s3, %s423
        %p425 = scmp.lt.s32.totalorder %s28, 1
        %s426 = scalar_select %p425, %s28, 1
        %p427 = scmp.lt.s32.totalorder %s29, 0
        %s428 = scalar_select %p427, %s29, 0
        %s429 = sadd.s32 %s428, %s426
        %s430 = smul.addr %s429, 8
        %s431 = scalar_lea.vmem %s9, %s430
        %v433 = vld [vmem:[%s364] sm:$0xff]
        %v434 = vld [vmem:[%s418] sm:$0x1]
        %v436 = vperm.slane %v434, 0
        %v438 = vmul.f32 %v433, %v436
        %v439 = vld [vmem:[%s421] sm:$0x1]
        %v441 = vperm.slane %v439, 0
        %v443 = vadd.f32 %v438, %v441
        %vm444 = vcmask 261120
        %v445 = vsel %vm444, %v443, 0.0
        %v446 = vrot.slane %v445, 4
        %v447 = vadd.f32 %v445, %v446
        %v448 = vrot.slane %v447, 2
        %v449 = vadd.f32 %v447, %v448
        %v450 = vrot.slane %v449, 1
        %v451 = vadd.f32 %v449, %v450
        %v452 = vrcp.pop 8.0
        %v453 = vmul.f32 8.0, %v452
        %v454 = vsub.f32 1.0, %v453
        %v455 = vmul.f32 %v452, %v454
        %v456 = vadd.f32 %v452, %v455
        %vm457 = vweird.f32 %v452
        %v458 = vsel %vm457, %v452, %v456
        %v459 = vmul.f32 %v451, %v458
        %v460 = vsub.f32 %v443, %v459
        %v461 = vmul.f32 %v460, %v460
        %v462 = vsel %vm444, %v461, 0.0
        %v463 = vrot.slane %v462, 4
        %v464 = vadd.f32 %v462, %v463
        %v465 = vrot.slane %v464, 2
        %v466 = vadd.f32 %v464, %v465
        %v467 = vrot.slane %v466, 1
        %v468 = vadd.f32 %v466, %v467
        %v469 = vmul.f32 %v468, %v458
        %v470 = vadd.f32 %v469, 1e-05
        %v471 = vrsqrt.pop %v470
        %v472 = vmul.f32 %v471, %v470
        %v473 = vmul.f32 %v472, %v471
        %v474 = vmul.f32 0.5, %v473
        %v475 = vsub.f32 1.5, %v474
        %v476 = vmul.f32 %v471, %v475
        %vm477 = vweird.f32 %v470
        %vm478 = vweird.f32 %v471
        %vm479 = vmor %vm477, %vm478
        %v480 = vsel %vm479, %v471, %v476
        %v481 = vmul.f32 %v460, %v480
        %v482 = vld [vmem:[%s4] sm:$0xff]
        %484 = vset.pattern.permute.xlu0 0
        %485 = vperm.xlu0 %484, %v482
        %v486 = vpop.permute.xlu0 %485
        %v488 = vmul.f32 %v481, %v486
        %v489 = vld [vmem:[%s5] sm:$0xff]
        %491 = vset.pattern.permute.xlu0 0
        %492 = vperm.xlu0 %491, %v489
        %v493 = vpop.permute.xlu0 %492
        %v495 = vadd.f32 %v488, %v493
        %v496 = vmul.f32 %v495, 1.75
        %v497 = vxor.u32 %v443, 2147483648
        %v498 = vmul.f32 %v497, 1.442695
        %v499 = vpow.pop %v498
        %v500 = vadd.f32 %v499, 1.0
        %v501 = vrcp.pop %v500
        %v502 = vmul.f32 %v500, %v501
        %v503 = vsub.f32 1.0, %v502
        %v504 = vmul.f32 %v501, %v503
        %v505 = vadd.f32 %v501, %v504
        %vm506 = vweird.f32 %v500
        %vm507 = vweird.f32 %v501
        %vm508 = vmor %vm506, %vm507
        %v509 = vsel %vm508, %v501, %v505
        %v510 = vand.u32 2147483647, %v500
        %vm511 = vcmp.eq.f32.partialorder %v510, 8.507059e+37
        %v512 = vand.u32 %v500, 2147483648
        %v513 = vor.u32 1.1754944e-38, %v512
        %v514 = vsel %vm511, %v513, %v509
        %v515 = vmul.f32 1.0, %v514
        %v516 = vmul.f32 %v443, %v515
        %v517 = vpack.c.bf16 %v516, %v516
        %v518 = vld [vmem:[%s7] sm:$0xf]
        %v519 = vld [vmem:[%s8] sm:$0xff]
        %521 = vset.pattern.permute.xlu0 0
        %522 = vperm.xlu0 %521, %v519
        %v523 = vpop.permute.xlu0 %522
        %vm525 = vcmask 64512
        %v527 = vsel %vm525, %v518, 0
        %vm529 = vcmask 1043456
        %v531 = vsel %vm529, %v517, 0
        %533 = vmatpush.bf16.msra.mxu0 0
        %534 = vmatpush.bf16.msra.mxu0 0
        %535 = vmatpush.bf16.msra.mxu0 0
        %536 = vmatpush.bf16.msra.mxu0 0
        %537 = vmatpush.bf16.msra.mxu0 0
        %538 = vmatpush.bf16.msra.mxu0 0
        %539 = vmatpush.bf16.msra.mxu0 0
        %540 = vmatpush.bf16.msra.mxu0 %v531
        %541 = vmatmul.bf16.gmra.mxu0 %v527
        %v542 = vpop.f32.mrf.mxu0
        %v543 = vadd.f32 %v523, %v542
        %v544 = vpop.f32.mrf.mxu0
        %545 = vdwg.mxu0
        %v546 = vsub.f32 %v496, -3.5
        %v547 = vmul.f32 %v546, %v546
        %v548 = vsub.f32 0.0, %v547
        %v549 = vmul.f32 %v548, 1.442695
        %v550 = vpow.pop %v549
        %v551 = vpack.c.bf16 %v550, %v550
        %v552 = vld [vmem:[#allocation4] sm:$0xf]
        %v554 = vsel %vm525, %v552, 0
        %v557 = vsel %vm529, %v551, 0
        %559 = vmatpush.bf16.msra.mxu0 0
        %560 = vmatpush.bf16.msra.mxu0 0
        %561 = vmatpush.bf16.msra.mxu0 0
        %562 = vmatpush.bf16.msra.mxu0 0
        %563 = vmatpush.bf16.msra.mxu0 0
        %564 = vmatpush.bf16.msra.mxu0 0
        %565 = vmatpush.bf16.msra.mxu0 0
        %566 = vmatpush.bf16.msra.mxu0 %v557
        %567 = vmatmul.bf16.gmra.mxu0 %v554
        %v568 = vpop.f32.mrf.mxu0
        %v569 = vadd.f32 0.0, %v568
        %v570 = vpop.f32.mrf.mxu0
        %571 = vdwg.mxu0
        %v572 = vadd.f32 %v543, %v569
        %v573 = vsub.f32 %v496, -2.5
        %v574 = vmul.f32 %v573, %v573
        %v575 = vsub.f32 0.0, %v574
        %v576 = vmul.f32 %v575, 1.442695
        %v577 = vpow.pop %v576
        %v578 = vpack.c.bf16 %v577, %v577
        %s579 = scalar_lea.vmem [#allocation4], 4
        %v580 = vld [vmem:[%s579] sm:$0xf]
        %v582 = vsel %vm525, %v580, 0
        %v585 = vsel %vm529, %v578, 0
        %587 = vmatpush.bf16.msra.mxu0 0
        %588 = vmatpush.bf16.msra.mxu0 0
        %589 = vmatpush.bf16.msra.mxu0 0
        %590 = vmatpush.bf16.msra.mxu0 0
        %591 = vmatpush.bf16.msra.mxu0 0
        %592 = vmatpush.bf16.msra.mxu0 0
        %593 = vmatpush.bf16.msra.mxu0 0
        %594 = vmatpush.bf16.msra.mxu0 %v585
        %595 = vmatmul.bf16.gmra.mxu0 %v582
        %v596 = vpop.f32.mrf.mxu0
        %v597 = vadd.f32 0.0, %v596
        %v598 = vpop.f32.mrf.mxu0
        %599 = vdwg.mxu0
        %v600 = vadd.f32 %v572, %v597
        %v601 = vsub.f32 %v496, -1.5
        %v602 = vmul.f32 %v601, %v601
        %v603 = vsub.f32 0.0, %v602
        %v604 = vmul.f32 %v603, 1.442695
        %v605 = vpow.pop %v604
        %v606 = vpack.c.bf16 %v605, %v605
        %s607 = scalar_lea.vmem [#allocation4], 8
        %v608 = vld [vmem:[%s607] sm:$0xf]
        %v610 = vsel %vm525, %v608, 0
        %v613 = vsel %vm529, %v606, 0
        %615 = vmatpush.bf16.msra.mxu0 0
        %616 = vmatpush.bf16.msra.mxu0 0
        %617 = vmatpush.bf16.msra.mxu0 0
        %618 = vmatpush.bf16.msra.mxu0 0
        %619 = vmatpush.bf16.msra.mxu0 0
        %620 = vmatpush.bf16.msra.mxu0 0
        %621 = vmatpush.bf16.msra.mxu0 0
        %622 = vmatpush.bf16.msra.mxu0 %v613
        %623 = vmatmul.bf16.gmra.mxu0 %v610
        %v624 = vpop.f32.mrf.mxu0
        %v625 = vadd.f32 0.0, %v624
        %v626 = vpop.f32.mrf.mxu0
        %627 = vdwg.mxu0
        %v628 = vadd.f32 %v600, %v625
        %v629 = vsub.f32 %v496, -0.5
        %v630 = vmul.f32 %v629, %v629
        %v631 = vsub.f32 0.0, %v630
        %v632 = vmul.f32 %v631, 1.442695
        %v633 = vpow.pop %v632
        %v634 = vpack.c.bf16 %v633, %v633
        %s635 = scalar_lea.vmem [#allocation4], 12
        %v636 = vld [vmem:[%s635] sm:$0xf]
        %v638 = vsel %vm525, %v636, 0
        %v641 = vsel %vm529, %v634, 0
        %643 = vmatpush.bf16.msra.mxu0 0
        %644 = vmatpush.bf16.msra.mxu0 0
        %645 = vmatpush.bf16.msra.mxu0 0
        %646 = vmatpush.bf16.msra.mxu0 0
        %647 = vmatpush.bf16.msra.mxu0 0
        %648 = vmatpush.bf16.msra.mxu0 0
        %649 = vmatpush.bf16.msra.mxu0 0
        %650 = vmatpush.bf16.msra.mxu0 %v641
        %651 = vmatmul.bf16.gmra.mxu0 %v638
        %v652 = vpop.f32.mrf.mxu0
        %v653 = vadd.f32 0.0, %v652
        %v654 = vpop.f32.mrf.mxu0
        %655 = vdwg.mxu0
        %v656 = vadd.f32 %v628, %v653
        %v657 = vsub.f32 %v496, 0.5
        %v658 = vmul.f32 %v657, %v657
        %v659 = vsub.f32 0.0, %v658
        %v660 = vmul.f32 %v659, 1.442695
        %v661 = vpow.pop %v660
        %v662 = vpack.c.bf16 %v661, %v661
        %s663 = scalar_lea.vmem [#allocation4], 16
        %v664 = vld [vmem:[%s663] sm:$0xf]
        %v666 = vsel %vm525, %v664, 0
        %v669 = vsel %vm529, %v662, 0
        %671 = vmatpush.bf16.msra.mxu0 0
        %672 = vmatpush.bf16.msra.mxu0 0
        %673 = vmatpush.bf16.msra.mxu0 0
        %674 = vmatpush.bf16.msra.mxu0 0
        %675 = vmatpush.bf16.msra.mxu0 0
        %676 = vmatpush.bf16.msra.mxu0 0
        %677 = vmatpush.bf16.msra.mxu0 0
        %678 = vmatpush.bf16.msra.mxu0 %v669
        %679 = vmatmul.bf16.gmra.mxu0 %v666
        %v680 = vpop.f32.mrf.mxu0
        %v681 = vadd.f32 0.0, %v680
        %v682 = vpop.f32.mrf.mxu0
        %683 = vdwg.mxu0
        %v684 = vadd.f32 %v656, %v681
        %v685 = vsub.f32 %v496, 1.5
        %v686 = vmul.f32 %v685, %v685
        %v687 = vsub.f32 0.0, %v686
        %v688 = vmul.f32 %v687, 1.442695
        %v689 = vpow.pop %v688
        %v690 = vpack.c.bf16 %v689, %v689
        %s691 = scalar_lea.vmem [#allocation4], 20
        %v692 = vld [vmem:[%s691] sm:$0xf]
        %v694 = vsel %vm525, %v692, 0
        %v697 = vsel %vm529, %v690, 0
        %699 = vmatpush.bf16.msra.mxu0 0
        %700 = vmatpush.bf16.msra.mxu0 0
        %701 = vmatpush.bf16.msra.mxu0 0
        %702 = vmatpush.bf16.msra.mxu0 0
        %703 = vmatpush.bf16.msra.mxu0 0
        %704 = vmatpush.bf16.msra.mxu0 0
        %705 = vmatpush.bf16.msra.mxu0 0
        %706 = vmatpush.bf16.msra.mxu0 %v697
        %707 = vmatmul.bf16.gmra.mxu0 %v694
        %v708 = vpop.f32.mrf.mxu0
        %v709 = vadd.f32 0.0, %v708
        %v710 = vpop.f32.mrf.mxu0
        %711 = vdwg.mxu0
        %v712 = vadd.f32 %v684, %v709
        %v713 = vsub.f32 %v496, 2.5
        %v714 = vmul.f32 %v713, %v713
        %v715 = vsub.f32 0.0, %v714
        %v716 = vmul.f32 %v715, 1.442695
        %v717 = vpow.pop %v716
        %v718 = vpack.c.bf16 %v717, %v717
        %s719 = scalar_lea.vmem [#allocation4], 24
        %v720 = vld [vmem:[%s719] sm:$0xf]
        %v722 = vsel %vm525, %v720, 0
        %v725 = vsel %vm529, %v718, 0
        %727 = vmatpush.bf16.msra.mxu0 0
        %728 = vmatpush.bf16.msra.mxu0 0
        %729 = vmatpush.bf16.msra.mxu0 0
        %730 = vmatpush.bf16.msra.mxu0 0
        %731 = vmatpush.bf16.msra.mxu0 0
        %732 = vmatpush.bf16.msra.mxu0 0
        %733 = vmatpush.bf16.msra.mxu0 0
        %734 = vmatpush.bf16.msra.mxu0 %v725
        %735 = vmatmul.bf16.gmra.mxu0 %v722
        %v736 = vpop.f32.mrf.mxu0
        %v737 = vadd.f32 0.0, %v736
        %v738 = vpop.f32.mrf.mxu0
        %739 = vdwg.mxu0
        %v740 = vadd.f32 %v712, %v737
        %v741 = vsub.f32 %v496, 3.5
        %v742 = vmul.f32 %v741, %v741
        %v743 = vsub.f32 0.0, %v742
        %v744 = vmul.f32 %v743, 1.442695
        %v745 = vpow.pop %v744
        %v746 = vpack.c.bf16 %v745, %v745
        %s747 = scalar_lea.vmem [#allocation4], 28
        %v748 = vld [vmem:[%s747] sm:$0xf]
        %v750 = vsel %vm525, %v748, 0
        %v753 = vsel %vm529, %v746, 0
        %755 = vmatpush.bf16.msra.mxu0 0
        %756 = vmatpush.bf16.msra.mxu0 0
        %757 = vmatpush.bf16.msra.mxu0 0
        %758 = vmatpush.bf16.msra.mxu0 0
        %759 = vmatpush.bf16.msra.mxu0 0
        %760 = vmatpush.bf16.msra.mxu0 0
        %761 = vmatpush.bf16.msra.mxu0 0
        %762 = vmatpush.bf16.msra.mxu0 %v753
        %763 = vmatmul.bf16.gmra.mxu0 %v750
        %v764 = vpop.f32.mrf.mxu0
        %v765 = vadd.f32 0.0, %v764
        %v766 = vpop.f32.mrf.mxu0
        %767 = vdwg.mxu0
        %v768 = vadd.f32 %v740, %v765
        %v769 = vld [vmem:[%s424] sm:$0x1]
        %v771 = vperm.slane %v769, 0
        %v773 = vmul.f32 %v771, %v768
        %v774 = vadd.f32 %v433, %v773
        %775 = vst.msk [vmem:[%s431] sm:$0xff] %vm444, %v774
        %p776 = scmp.lt.s32.totalorder %s28, 1
        %s777 = scalar_select %p776, %s28, 1
        %p778 = scmp.lt.s32.totalorder %s29, 0
        %s779 = scalar_select %p778, %s29, 0
        %s780 = sadd.s32 %s779, %s777
        %s781 = smul.addr %s780, 8
        %s782 = scalar_lea.vmem %s9, %s781
        // Predicated region
        $region65: #{reskan_block.2} parent=55 // pred_check
          %p783 = pneg %p267
        $region66: #{reskan_block.2} parent=55 // pred_check_branch
          %785 = sbr.rel (%p783) target = $region68
        $region67: #{reskan_block.2} parent=55 // pred_region
          _
        $region68: #{reskan_block.2} parent=55 // pred_fallthru
          _
      $region56: #{reskan_block.2} parent=5 // pred_fallthru
        _
      %p786 = scmp.le.s32.totalorder 2, %s19
      // Predicated region
      $region69: #{reskan_block.2} parent=5 // pred_check
        %p787 = pneg %p786
      $region70: #{reskan_block.2} parent=5 // pred_check_branch
        %789 = sbr.rel (%p787) target = $region72
      $region71: #{reskan_block.2} parent=5 // pred_region
        %s790 = ssub.s32 %s19, 2
        // Predicated region
        $region73: #{reskan_block.2} parent=71 // pred_check
          %p791 = pneg %p273
        $region74: #{reskan_block.2} parent=71 // pred_check_branch
          %793 = sbr.rel (%p791) target = $region76
        $region75: #{reskan_block.2} parent=71 // pred_region
          %p794 = scmp.lt.s32.totalorder %s30, 1
          %s795 = scalar_select %p794, %s30, 1
          %p796 = scmp.lt.s32.totalorder %s31, 0
          %s797 = scalar_select %p796, %s31, 0
          %s798 = sadd.s32 %s797, %s795
          %s799 = smul.addr %s798, 8
          %s800 = scalar_lea.vmem %s9, %s799
        $region76: #{reskan_block.2} parent=71 // pred_fallthru
          _
      $region72: #{reskan_block.2} parent=5 // pred_fallthru
        _
    $region6: #{reskan_block.2} parent=1 // loop_footer
      %s23 = sadd.s32 1, %s19
    $region7: #{reskan_block.2} parent=1 // loop_footer_branch
      %18 = sbr.rel target = $region3
    $region8: #{reskan_block.2} parent=1 // loop_exit
      _
    %801 = vsyncpa [#allocation3], 1
    %s802 = scalar_lea.sflag [#allocation3], 1
    %803 = vsyncpa %s802, 1
    %804 = vsyncpa [#allocation5], 1

// kernel: reskan_block.3
$region0: #{reskan_block.3}
  #allocation0 [shape = 'u32[]', space=smem, size = 0x4, offset = 0x4, fixed_abs, tag = 'smem constant byte address 0x4 - core index']
  #allocation1 [shape = 'u32[72,128]{1,0:T(1,128)}', space=vmem, size = 0x9000, scoped, tag = 'internal scratch']
  %s0 = inlined_call_operand.vmem [shape: f32[16,32], index: 0, kind: input, shape index: {}]
  %s1 = inlined_call_operand.vmem [shape: f32[1,32], index: 1, kind: input, shape index: {}]
  %s2 = inlined_call_operand.vmem [shape: f32[1,32], index: 2, kind: input, shape index: {}]
  %s3 = inlined_call_operand.vmem [shape: f32[1,32], index: 3, kind: input, shape index: {}]
  %s4 = inlined_call_operand.vmem [shape: f32[1,32], index: 4, kind: input, shape index: {}]
  %s5 = inlined_call_operand.vmem [shape: f32[1,32], index: 5, kind: input, shape index: {}]
  %s6 = inlined_call_operand.vmem [shape: bf16[8,32,64], index: 6, kind: input, shape index: {}]
  %s7 = inlined_call_operand.vmem [shape: bf16[32,64], index: 7, kind: input, shape index: {}]
  %s8 = inlined_call_operand.vmem [shape: f32[1,64], index: 8, kind: input, shape index: {}]
  %s9 = inlined_call_operand.vmem [shape: f32[1,64], index: 9, kind: input, shape index: {}]
  %s10 = inlined_call_operand.vmem [shape: f32[1,64], index: 10, kind: input, shape index: {}]
  %s11 = inlined_call_operand.vmem [shape: bf16[8,64,32], index: 11, kind: input, shape index: {}]
  %s12 = inlined_call_operand.vmem [shape: bf16[64,32], index: 12, kind: input, shape index: {}]
  %s13 = inlined_call_operand.vmem [shape: f32[1,32], index: 13, kind: input, shape index: {}]
  %s14 = inlined_call_operand.hbm [shape: f32[16,32], index: 14, kind: output, shape index: {}]
  %s15 = sld [smem:[#allocation0]]
  $region66: #{reskan_block.3} parent=0
    _
  %s17 = ssub.s32 1, %s15
  %s18 = scalar_select 0, %s17, %s15
  $region1: #{reskan_block.3} parent=0
    #allocation2 [shape = 'u8[8192]{0}', space=vmem, size = 0x2000, scoped, tag = 'output window, operand 0, single buffered']
    #allocation3 [shape = 's32[1]{0}', space=sflag, size = 0x4, scoped, tag = 'scoped memory for reskan_block.3']
    %19 = vsyncpa [#allocation3], 0
    // Predicated region
    $region2: #{reskan_block.3} parent=1 // pred_check
      _
    $region3: #{reskan_block.3} parent=1 // pred_check_branch
      %21 = sbr.rel (0) target = $region5
    $region4: #{reskan_block.3} parent=1 // pred_region
      _
    $region5: #{reskan_block.3} parent=1 // pred_fallthru
      _
    // Predicated region
    $region6: #{reskan_block.3} parent=1 // pred_check
      _
    $region7: #{reskan_block.3} parent=1 // pred_check_branch
      %23 = sbr.rel (0) target = $region9
    $region8: #{reskan_block.3} parent=1 // pred_region
      _
    $region9: #{reskan_block.3} parent=1 // pred_fallthru
      _
    // Predicated region
    $region10: #{reskan_block.3} parent=1 // pred_check
      _
    $region11: #{reskan_block.3} parent=1 // pred_check_branch
      %25 = sbr.rel (0) target = $region13
    $region12: #{reskan_block.3} parent=1 // pred_region
      _
    $region13: #{reskan_block.3} parent=1 // pred_fallthru
      _
    // Predicated region
    $region14: #{reskan_block.3} parent=1 // pred_check
      _
    $region15: #{reskan_block.3} parent=1 // pred_check_branch
      %27 = sbr.rel (0) target = $region17
    $region16: #{reskan_block.3} parent=1 // pred_region
      _
    $region17: #{reskan_block.3} parent=1 // pred_fallthru
      _
    // Predicated region
    $region18: #{reskan_block.3} parent=1 // pred_check
      _
    $region19: #{reskan_block.3} parent=1 // pred_check_branch
      %29 = sbr.rel (0) target = $region21
    $region20: #{reskan_block.3} parent=1 // pred_region
      _
    $region21: #{reskan_block.3} parent=1 // pred_fallthru
      _
    // Predicated region
    $region22: #{reskan_block.3} parent=1 // pred_check
      _
    $region23: #{reskan_block.3} parent=1 // pred_check_branch
      %31 = sbr.rel (0) target = $region25
    $region24: #{reskan_block.3} parent=1 // pred_region
      _
    $region25: #{reskan_block.3} parent=1 // pred_fallthru
      _
    // Predicated region
    $region26: #{reskan_block.3} parent=1 // pred_check
      _
    $region27: #{reskan_block.3} parent=1 // pred_check_branch
      %33 = sbr.rel (0) target = $region29
    $region28: #{reskan_block.3} parent=1 // pred_region
      _
    $region29: #{reskan_block.3} parent=1 // pred_fallthru
      _
    // Predicated region
    $region30: #{reskan_block.3} parent=1 // pred_check
      _
    $region31: #{reskan_block.3} parent=1 // pred_check_branch
      %35 = sbr.rel (0) target = $region33
    $region32: #{reskan_block.3} parent=1 // pred_region
      _
    $region33: #{reskan_block.3} parent=1 // pred_fallthru
      _
    // Predicated region
    $region34: #{reskan_block.3} parent=1 // pred_check
      _
    $region35: #{reskan_block.3} parent=1 // pred_check_branch
      %37 = sbr.rel (0) target = $region37
    $region36: #{reskan_block.3} parent=1 // pred_region
      _
    $region37: #{reskan_block.3} parent=1 // pred_fallthru
      _
    // Predicated region
    $region38: #{reskan_block.3} parent=1 // pred_check
      _
    $region39: #{reskan_block.3} parent=1 // pred_check_branch
      %39 = sbr.rel (0) target = $region41
    $region40: #{reskan_block.3} parent=1 // pred_region
      _
    $region41: #{reskan_block.3} parent=1 // pred_fallthru
      _
    // Predicated region
    $region42: #{reskan_block.3} parent=1 // pred_check
      _
    $region43: #{reskan_block.3} parent=1 // pred_check_branch
      %41 = sbr.rel (0) target = $region45
    $region44: #{reskan_block.3} parent=1 // pred_region
      _
    $region45: #{reskan_block.3} parent=1 // pred_fallthru
      _
    // Predicated region
    $region46: #{reskan_block.3} parent=1 // pred_check
      _
    $region47: #{reskan_block.3} parent=1 // pred_check_branch
      %43 = sbr.rel (0) target = $region49
    $region48: #{reskan_block.3} parent=1 // pred_region
      _
    $region49: #{reskan_block.3} parent=1 // pred_fallthru
      _
    // Predicated region
    $region50: #{reskan_block.3} parent=1 // pred_check
      _
    $region51: #{reskan_block.3} parent=1 // pred_check_branch
      %45 = sbr.rel (0) target = $region53
    $region52: #{reskan_block.3} parent=1 // pred_region
      _
    $region53: #{reskan_block.3} parent=1 // pred_fallthru
      _
    // Predicated region
    $region54: #{reskan_block.3} parent=1 // pred_check
      _
    $region55: #{reskan_block.3} parent=1 // pred_check_branch
      %47 = sbr.rel (0) target = $region57
    $region56: #{reskan_block.3} parent=1 // pred_region
      _
    $region57: #{reskan_block.3} parent=1 // pred_fallthru
      _
    %v49 = vld [vmem:[%s0] sm:$0xff]
    %v50 = vld [vmem:[%s0 + $0x8] sm:$0xff]
    %v51 = vld [vmem:[%s1] sm:$0x1]
    %v53 = vperm.slane %v51, 0
    %v55 = vmul.f32 %v49, %v53
    %v56 = vmul.f32 %v50, %v53
    %v57 = vld [vmem:[%s2] sm:$0x1]
    %v59 = vperm.slane %v57, 0
    %v61 = vadd.f32 %v55, %v59
    %v62 = vadd.f32 %v56, %v59
    %v63 = vld [vmem:[%s4] sm:$0x1]
    %v64 = vld [vmem:[%s5] sm:$0x1]
    %v65 = vld [vmem:[%s7] sm:$0xf]
    %v66 = vld [vmem:[%s7 + $0x4] sm:$0xf]
    %v67 = vld [vmem:[%s7 + $0x8] sm:$0xf]
    %v68 = vld [vmem:[%s7 + $0xc] sm:$0xf]
    %v69 = vld [vmem:[%s8] sm:$0x1]
    %vm70 = vcmask 261120
    %v71 = vsel %vm70, %v61, 0.0
    %72 = vadd.xlane.f32.xlu0 %v71
    %v73 = vpop.xlane.xlu0 %72
    %v74 = vsel %vm70, %v62, 0.0
    %75 = vadd.xlane.f32.xlu0 %v74
    %v76 = vpop.xlane.xlu0 %75
    %v77 = vrcp.pop 32.0
    %v78 = vmul.f32 32.0, %v77
    %v79 = vsub.f32 1.0, %v78
    %v80 = vmul.f32 %v77, %v79
    %v81 = vadd.f32 %v77, %v80
    %vm82 = vweird.f32 %v77
    %v83 = vsel %vm82, %v77, %v81
    %v84 = vmul.f32 %v73, %v83
    %v85 = vmul.f32 %v76, %v83
    %v86 = vsub.f32 %v61, %v84
    %v87 = vsub.f32 %v62, %v85
    %v88 = vmul.f32 %v86, %v86
    %v89 = vmul.f32 %v87, %v87
    %v90 = vsel %vm70, %v88, 0.0
    %91 = vadd.xlane.f32.xlu0 %v90
    %v92 = vpop.xlane.xlu0 %91
    %v93 = vsel %vm70, %v89, 0.0
    %94 = vadd.xlane.f32.xlu0 %v93
    %v95 = vpop.xlane.xlu0 %94
    %v96 = vmul.f32 %v92, %v83
    %v97 = vmul.f32 %v95, %v83
    %v98 = vadd.f32 %v96, 1e-05
    %v99 = vadd.f32 %v97, 1e-05
    %v100 = vrsqrt.pop %v98
    %v101 = vmul.f32 %v100, %v98
    %v102 = vmul.f32 %v101, %v100
    %v103 = vmul.f32 0.5, %v102
    %v104 = vsub.f32 1.5, %v103
    %v105 = vmul.f32 %v100, %v104
    %vm106 = vweird.f32 %v98
    %vm107 = vweird.f32 %v100
    %vm108 = vmor %vm106, %vm107
    %v109 = vsel %vm108, %v100, %v105
    %v110 = vrsqrt.pop %v99
    %v111 = vmul.f32 %v110, %v99
    %v112 = vmul.f32 %v111, %v110
    %v113 = vmul.f32 0.5, %v112
    %v114 = vsub.f32 1.5, %v113
    %v115 = vmul.f32 %v110, %v114
    %vm116 = vweird.f32 %v99
    %vm117 = vweird.f32 %v110
    %vm118 = vmor %vm116, %vm117
    %v119 = vsel %vm118, %v110, %v115
    %v120 = vmul.f32 %v86, %v109
    %v121 = vmul.f32 %v87, %v119
    %v123 = vperm.slane %v63, 0
    %v125 = vmul.f32 %v120, %v123
    %v126 = vmul.f32 %v121, %v123
    %v128 = vperm.slane %v64, 0
    %v130 = vadd.f32 %v125, %v128
    %v131 = vadd.f32 %v126, %v128
    %v132 = vmul.f32 %v130, 1.75
    %v133 = vmul.f32 %v131, 1.75
    %v134 = vxor.u32 %v61, 2147483648
    %v135 = vxor.u32 %v62, 2147483648
    %v136 = vmul.f32 %v134, 1.442695
    %v137 = vpow.pop %v136
    %v138 = vmul.f32 %v135, 1.442695
    %v139 = vpow.pop %v138
    %v140 = vadd.f32 %v137, 1.0
    %v141 = vadd.f32 %v139, 1.0
    %v142 = vrcp.pop %v140
    %v143 = vmul.f32 %v140, %v142
    %v144 = vsub.f32 1.0, %v143
    %v145 = vmul.f32 %v142, %v144
    %v146 = vadd.f32 %v142, %v145
    %vm147 = vweird.f32 %v140
    %vm148 = vweird.f32 %v142
    %vm149 = vmor %vm147, %vm148
    %v150 = vsel %vm149, %v142, %v146
    %v151 = vand.u32 2147483647, %v140
    %vm152 = vcmp.eq.f32.partialorder %v151, 8.507059e+37
    %v153 = vand.u32 %v140, 2147483648
    %v154 = vor.u32 1.1754944e-38, %v153
    %v155 = vsel %vm152, %v154, %v150
    %v156 = vmul.f32 1.0, %v155
    %v157 = vrcp.pop %v141
    %v158 = vmul.f32 %v141, %v157
    %v159 = vsub.f32 1.0, %v158
    %v160 = vmul.f32 %v157, %v159
    %v161 = vadd.f32 %v157, %v160
    %vm162 = vweird.f32 %v141
    %vm163 = vweird.f32 %v157
    %vm164 = vmor %vm162, %vm163
    %v165 = vsel %vm164, %v157, %v161
    %v166 = vand.u32 2147483647, %v141
    %vm167 = vcmp.eq.f32.partialorder %v166, 8.507059e+37
    %v168 = vand.u32 %v141, 2147483648
    %v169 = vor.u32 1.1754944e-38, %v168
    %v170 = vsel %vm167, %v169, %v165
    %v171 = vmul.f32 1.0, %v170
    %v172 = vmul.f32 %v61, %v156
    %v173 = vmul.f32 %v62, %v171
    %v174 = vpack.c.bf16 %v173, %v172
    %v176 = vperm.slane %v69, 0
    %v182 = vunpack.c.l.b16 %v65
    %v183 = vunpack.c.l.b16 %v66
    %v184 = vunpack.c.l.b16 %v67
    %v185 = vunpack.c.l.b16 %v68
    %v186 = vpack.c.b16 %v183, %v182
    %v187 = vpack.c.b16 %v185, %v184
    %v191 = vsel %vm70, %v174, 0
    %193 = vmatpush.bf16.msra.mxu0 0
    %194 = vmatpush.bf16.msra.mxu0 0
    %195 = vmatpush.bf16.msra.mxu0 0
    %196 = vmatpush.bf16.msra.mxu0 0
    %197 = vmatpush.bf16.msra.mxu0 0
    %198 = vmatpush.bf16.msra.mxu0 0
    %199 = vmatpush.bf16.msra.mxu0 %v187
    %200 = vmatpush.bf16.msra.mxu0 %v186
    %201 = vmatmul.bf16.gmra.mxu0 %v191
    %v202 = vpop.f32.mrf.mxu0
    %v203 = vadd.f32 %v176, %v202
    %v204 = vpop.f32.mrf.mxu0
    %v205 = vadd.f32 %v176, %v204
    %206 = vdwg.mxu0
    %v207 = vsub.f32 %v132, -3.5
    %v208 = vsub.f32 %v133, -3.5
    %v209 = vmul.f32 %v207, %v207
    %v210 = vmul.f32 %v208, %v208
    %v211 = vsub.f32 0.0, %v209
    %v212 = vsub.f32 0.0, %v210
    %v213 = vmul.f32 %v211, 1.442695
    %v214 = vpow.pop %v213
    %v215 = vmul.f32 %v212, 1.442695
    %v216 = vpow.pop %v215
    %v217 = vpack.c.bf16 %v216, %v214
    %v218 = vld [vmem:[%s6] sm:$0xf]
    %v219 = vld [vmem:[%s6 + $0x4] sm:$0xf]
    %v220 = vld [vmem:[%s6 + $0x8] sm:$0xf]
    %v221 = vld [vmem:[%s6 + $0xc] sm:$0xf]
    %v226 = vunpack.c.l.b16 %v218
    %v227 = vunpack.c.l.b16 %v219
    %v228 = vunpack.c.l.b16 %v220
    %v229 = vunpack.c.l.b16 %v221
    %v230 = vpack.c.b16 %v227, %v226
    %v231 = vpack.c.b16 %v229, %v228
    %v235 = vsel %vm70, %v217, 0
    %237 = vmatpush.bf16.msra.mxu0 0
    %238 = vmatpush.bf16.msra.mxu0 0
    %239 = vmatpush.bf16.msra.mxu0 0
    %240 = vmatpush.bf16.msra.mxu0 0
    %241 = vmatpush.bf16.msra.mxu0 0
    %242 = vmatpush.bf16.msra.mxu0 0
    %243 = vmatpush.bf16.msra.mxu0 %v231
    %244 = vmatpush.bf16.msra.mxu0 %v230
    %245 = vmatmul.bf16.gmra.mxu0 %v235
    %v246 = vpop.f32.mrf.mxu0
    %v247 = vadd.f32 0.0, %v246
    %v248 = vpop.f32.mrf.mxu0
    %v249 = vadd.f32 0.0, %v248
    %250 = vdwg.mxu0
    %v251 = vadd.f32 %v203, %v247
    %v252 = vadd.f32 %v205, %v249
    %v253 = vsub.f32 %v132, -2.5
    %v254 = vsub.f32 %v133, -2.5
    %v255 = vmul.f32 %v253, %v253
    %v256 = vmul.f32 %v254, %v254
    %v257 = vsub.f32 0.0, %v255
    %v258 = vsub.f32 0.0, %v256
    %v259 = vmul.f32 %v257, 1.442695
    %v260 = vpow.pop %v259
    %v261 = vmul.f32 %v258, 1.442695
    %v262 = vpow.pop %v261
    %v263 = vpack.c.bf16 %v262, %v260
    %s264 = scalar_lea.vmem %s6, 16
    %v265 = vld [vmem:[%s264] sm:$0xf]
    %v266 = vld [vmem:[%s264 + $0x4] sm:$0xf]
    %v267 = vld [vmem:[%s264 + $0x8] sm:$0xf]
    %v268 = vld [vmem:[%s264 + $0xc] sm:$0xf]
    %v273 = vunpack.c.l.b16 %v265
    %v274 = vunpack.c.l.b16 %v266
    %v275 = vunpack.c.l.b16 %v267
    %v276 = vunpack.c.l.b16 %v268
    %v277 = vpack.c.b16 %v274, %v273
    %v278 = vpack.c.b16 %v276, %v275
    %v282 = vsel %vm70, %v263, 0
    %284 = vmatpush.bf16.msra.mxu0 0
    %285 = vmatpush.bf16.msra.mxu0 0
    %286 = vmatpush.bf16.msra.mxu0 0
    %287 = vmatpush.bf16.msra.mxu0 0
    %288 = vmatpush.bf16.msra.mxu0 0
    %289 = vmatpush.bf16.msra.mxu0 0
    %290 = vmatpush.bf16.msra.mxu0 %v278
    %291 = vmatpush.bf16.msra.mxu0 %v277
    %292 = vmatmul.bf16.gmra.mxu0 %v282
    %v293 = vpop.f32.mrf.mxu0
    %v294 = vadd.f32 0.0, %v293
    %v295 = vpop.f32.mrf.mxu0
    %v296 = vadd.f32 0.0, %v295
    %297 = vdwg.mxu0
    %v298 = vadd.f32 %v251, %v294
    %v299 = vadd.f32 %v252, %v296
    %v300 = vsub.f32 %v132, -1.5
    %v301 = vsub.f32 %v133, -1.5
    %v302 = vmul.f32 %v300, %v300
    %v303 = vmul.f32 %v301, %v301
    %v304 = vsub.f32 0.0, %v302
    %v305 = vsub.f32 0.0, %v303
    %v306 = vmul.f32 %v304, 1.442695
    %v307 = vpow.pop %v306
    %v308 = vmul.f32 %v305, 1.442695
    %v309 = vpow.pop %v308
    %v310 = vpack.c.bf16 %v309, %v307
    %s311 = scalar_lea.vmem %s6, 32
    %v312 = vld [vmem:[%s311] sm:$0xf]
    %v313 = vld [vmem:[%s311 + $0x4] sm:$0xf]
    %v314 = vld [vmem:[%s311 + $0x8] sm:$0xf]
    %v315 = vld [vmem:[%s311 + $0xc] sm:$0xf]
    %v320 = vunpack.c.l.b16 %v312
    %v321 = vunpack.c.l.b16 %v313
    %v322 = vunpack.c.l.b16 %v314
    %v323 = vunpack.c.l.b16 %v315
    %v324 = vpack.c.b16 %v321, %v320
    %v325 = vpack.c.b16 %v323, %v322
    %v329 = vsel %vm70, %v310, 0
    %331 = vmatpush.bf16.msra.mxu0 0
    %332 = vmatpush.bf16.msra.mxu0 0
    %333 = vmatpush.bf16.msra.mxu0 0
    %334 = vmatpush.bf16.msra.mxu0 0
    %335 = vmatpush.bf16.msra.mxu0 0
    %336 = vmatpush.bf16.msra.mxu0 0
    %337 = vmatpush.bf16.msra.mxu0 %v325
    %338 = vmatpush.bf16.msra.mxu0 %v324
    %339 = vmatmul.bf16.gmra.mxu0 %v329
    %v340 = vpop.f32.mrf.mxu0
    %v341 = vadd.f32 0.0, %v340
    %v342 = vpop.f32.mrf.mxu0
    %v343 = vadd.f32 0.0, %v342
    %344 = vdwg.mxu0
    %v345 = vadd.f32 %v298, %v341
    %v346 = vadd.f32 %v299, %v343
    %v347 = vsub.f32 %v132, -0.5
    %v348 = vsub.f32 %v133, -0.5
    %v349 = vmul.f32 %v347, %v347
    %v350 = vmul.f32 %v348, %v348
    %v351 = vsub.f32 0.0, %v349
    %v352 = vsub.f32 0.0, %v350
    %v353 = vmul.f32 %v351, 1.442695
    %v354 = vpow.pop %v353
    %v355 = vmul.f32 %v352, 1.442695
    %v356 = vpow.pop %v355
    %v357 = vpack.c.bf16 %v356, %v354
    %s358 = scalar_lea.vmem %s6, 48
    %v359 = vld [vmem:[%s358] sm:$0xf]
    %v360 = vld [vmem:[%s358 + $0x4] sm:$0xf]
    %v361 = vld [vmem:[%s358 + $0x8] sm:$0xf]
    %v362 = vld [vmem:[%s358 + $0xc] sm:$0xf]
    %v367 = vunpack.c.l.b16 %v359
    %v368 = vunpack.c.l.b16 %v360
    %v369 = vunpack.c.l.b16 %v361
    %v370 = vunpack.c.l.b16 %v362
    %v371 = vpack.c.b16 %v368, %v367
    %v372 = vpack.c.b16 %v370, %v369
    %v376 = vsel %vm70, %v357, 0
    %378 = vmatpush.bf16.msra.mxu0 0
    %379 = vmatpush.bf16.msra.mxu0 0
    %380 = vmatpush.bf16.msra.mxu0 0
    %381 = vmatpush.bf16.msra.mxu0 0
    %382 = vmatpush.bf16.msra.mxu0 0
    %383 = vmatpush.bf16.msra.mxu0 0
    %384 = vmatpush.bf16.msra.mxu0 %v372
    %385 = vmatpush.bf16.msra.mxu0 %v371
    %386 = vmatmul.bf16.gmra.mxu0 %v376
    %v387 = vpop.f32.mrf.mxu0
    %v388 = vadd.f32 0.0, %v387
    %v389 = vpop.f32.mrf.mxu0
    %v390 = vadd.f32 0.0, %v389
    %391 = vdwg.mxu0
    %v392 = vadd.f32 %v345, %v388
    %v393 = vadd.f32 %v346, %v390
    %v394 = vsub.f32 %v132, 0.5
    %v395 = vsub.f32 %v133, 0.5
    %v396 = vmul.f32 %v394, %v394
    %v397 = vmul.f32 %v395, %v395
    %v398 = vsub.f32 0.0, %v396
    %v399 = vsub.f32 0.0, %v397
    %v400 = vmul.f32 %v398, 1.442695
    %v401 = vpow.pop %v400
    %v402 = vmul.f32 %v399, 1.442695
    %v403 = vpow.pop %v402
    %v404 = vpack.c.bf16 %v403, %v401
    %s405 = scalar_lea.vmem %s6, 64
    %v406 = vld [vmem:[%s405] sm:$0xf]
    %v407 = vld [vmem:[%s405 + $0x4] sm:$0xf]
    %v408 = vld [vmem:[%s405 + $0x8] sm:$0xf]
    %v409 = vld [vmem:[%s405 + $0xc] sm:$0xf]
    %v414 = vunpack.c.l.b16 %v406
    %v415 = vunpack.c.l.b16 %v407
    %v416 = vunpack.c.l.b16 %v408
    %v417 = vunpack.c.l.b16 %v409
    %v418 = vpack.c.b16 %v415, %v414
    %v419 = vpack.c.b16 %v417, %v416
    %v423 = vsel %vm70, %v404, 0
    %425 = vmatpush.bf16.msra.mxu0 0
    %426 = vmatpush.bf16.msra.mxu0 0
    %427 = vmatpush.bf16.msra.mxu0 0
    %428 = vmatpush.bf16.msra.mxu0 0
    %429 = vmatpush.bf16.msra.mxu0 0
    %430 = vmatpush.bf16.msra.mxu0 0
    %431 = vmatpush.bf16.msra.mxu0 %v419
    %432 = vmatpush.bf16.msra.mxu0 %v418
    %433 = vmatmul.bf16.gmra.mxu0 %v423
    %v434 = vpop.f32.mrf.mxu0
    %v435 = vadd.f32 0.0, %v434
    %v436 = vpop.f32.mrf.mxu0
    %v437 = vadd.f32 0.0, %v436
    %438 = vdwg.mxu0
    %v439 = vadd.f32 %v392, %v435
    %v440 = vadd.f32 %v393, %v437
    %v441 = vsub.f32 %v132, 1.5
    %v442 = vsub.f32 %v133, 1.5
    %v443 = vmul.f32 %v441, %v441
    %v444 = vmul.f32 %v442, %v442
    %v445 = vsub.f32 0.0, %v443
    %v446 = vsub.f32 0.0, %v444
    %v447 = vmul.f32 %v445, 1.442695
    %v448 = vpow.pop %v447
    %v449 = vmul.f32 %v446, 1.442695
    %v450 = vpow.pop %v449
    %v451 = vpack.c.bf16 %v450, %v448
    %s452 = scalar_lea.vmem %s6, 80
    %v453 = vld [vmem:[%s452] sm:$0xf]
    %v454 = vld [vmem:[%s452 + $0x4] sm:$0xf]
    %v455 = vld [vmem:[%s452 + $0x8] sm:$0xf]
    %v456 = vld [vmem:[%s452 + $0xc] sm:$0xf]
    %v461 = vunpack.c.l.b16 %v453
    %v462 = vunpack.c.l.b16 %v454
    %v463 = vunpack.c.l.b16 %v455
    %v464 = vunpack.c.l.b16 %v456
    %v465 = vpack.c.b16 %v462, %v461
    %v466 = vpack.c.b16 %v464, %v463
    %v470 = vsel %vm70, %v451, 0
    %472 = vmatpush.bf16.msra.mxu0 0
    %473 = vmatpush.bf16.msra.mxu0 0
    %474 = vmatpush.bf16.msra.mxu0 0
    %475 = vmatpush.bf16.msra.mxu0 0
    %476 = vmatpush.bf16.msra.mxu0 0
    %477 = vmatpush.bf16.msra.mxu0 0
    %478 = vmatpush.bf16.msra.mxu0 %v466
    %479 = vmatpush.bf16.msra.mxu0 %v465
    %480 = vmatmul.bf16.gmra.mxu0 %v470
    %v481 = vpop.f32.mrf.mxu0
    %v482 = vadd.f32 0.0, %v481
    %v483 = vpop.f32.mrf.mxu0
    %v484 = vadd.f32 0.0, %v483
    %485 = vdwg.mxu0
    %v486 = vadd.f32 %v439, %v482
    %v487 = vadd.f32 %v440, %v484
    %v488 = vsub.f32 %v132, 2.5
    %v489 = vsub.f32 %v133, 2.5
    %v490 = vmul.f32 %v488, %v488
    %v491 = vmul.f32 %v489, %v489
    %v492 = vsub.f32 0.0, %v490
    %v493 = vsub.f32 0.0, %v491
    %v494 = vmul.f32 %v492, 1.442695
    %v495 = vpow.pop %v494
    %v496 = vmul.f32 %v493, 1.442695
    %v497 = vpow.pop %v496
    %v498 = vpack.c.bf16 %v497, %v495
    %s499 = scalar_lea.vmem %s6, 96
    %v500 = vld [vmem:[%s499] sm:$0xf]
    %v501 = vld [vmem:[%s499 + $0x4] sm:$0xf]
    %v502 = vld [vmem:[%s499 + $0x8] sm:$0xf]
    %v503 = vld [vmem:[%s499 + $0xc] sm:$0xf]
    %v508 = vunpack.c.l.b16 %v500
    %v509 = vunpack.c.l.b16 %v501
    %v510 = vunpack.c.l.b16 %v502
    %v511 = vunpack.c.l.b16 %v503
    %v512 = vpack.c.b16 %v509, %v508
    %v513 = vpack.c.b16 %v511, %v510
    %v517 = vsel %vm70, %v498, 0
    %519 = vmatpush.bf16.msra.mxu0 0
    %520 = vmatpush.bf16.msra.mxu0 0
    %521 = vmatpush.bf16.msra.mxu0 0
    %522 = vmatpush.bf16.msra.mxu0 0
    %523 = vmatpush.bf16.msra.mxu0 0
    %524 = vmatpush.bf16.msra.mxu0 0
    %525 = vmatpush.bf16.msra.mxu0 %v513
    %526 = vmatpush.bf16.msra.mxu0 %v512
    %527 = vmatmul.bf16.gmra.mxu0 %v517
    %v528 = vpop.f32.mrf.mxu0
    %v529 = vadd.f32 0.0, %v528
    %v530 = vpop.f32.mrf.mxu0
    %v531 = vadd.f32 0.0, %v530
    %532 = vdwg.mxu0
    %v533 = vadd.f32 %v486, %v529
    %v534 = vadd.f32 %v487, %v531
    %v535 = vsub.f32 %v132, 3.5
    %v536 = vsub.f32 %v133, 3.5
    %v537 = vmul.f32 %v535, %v535
    %v538 = vmul.f32 %v536, %v536
    %v539 = vsub.f32 0.0, %v537
    %v540 = vsub.f32 0.0, %v538
    %v541 = vmul.f32 %v539, 1.442695
    %v542 = vpow.pop %v541
    %v543 = vmul.f32 %v540, 1.442695
    %v544 = vpow.pop %v543
    %v545 = vpack.c.bf16 %v544, %v542
    %s546 = scalar_lea.vmem %s6, 112
    %v547 = vld [vmem:[%s546] sm:$0xf]
    %v548 = vld [vmem:[%s546 + $0x4] sm:$0xf]
    %v549 = vld [vmem:[%s546 + $0x8] sm:$0xf]
    %v550 = vld [vmem:[%s546 + $0xc] sm:$0xf]
    %v555 = vunpack.c.l.b16 %v547
    %v556 = vunpack.c.l.b16 %v548
    %v557 = vunpack.c.l.b16 %v549
    %v558 = vunpack.c.l.b16 %v550
    %v559 = vpack.c.b16 %v556, %v555
    %v560 = vpack.c.b16 %v558, %v557
    %v564 = vsel %vm70, %v545, 0
    %566 = vmatpush.bf16.msra.mxu0 0
    %567 = vmatpush.bf16.msra.mxu0 0
    %568 = vmatpush.bf16.msra.mxu0 0
    %569 = vmatpush.bf16.msra.mxu0 0
    %570 = vmatpush.bf16.msra.mxu0 0
    %571 = vmatpush.bf16.msra.mxu0 0
    %572 = vmatpush.bf16.msra.mxu0 %v560
    %573 = vmatpush.bf16.msra.mxu0 %v559
    %574 = vmatmul.bf16.gmra.mxu0 %v564
    %v575 = vpop.f32.mrf.mxu0
    %v576 = vadd.f32 0.0, %v575
    %v577 = vpop.f32.mrf.mxu0
    %v578 = vadd.f32 0.0, %v577
    %579 = vdwg.mxu0
    %v580 = vadd.f32 %v533, %v576
    %v581 = vadd.f32 %v534, %v578
    %v582 = vld [vmem:[%s9] sm:$0x1]
    %v583 = vld [vmem:[%s10] sm:$0x1]
    %v584 = vld [vmem:[%s12] sm:$0xf]
    %v585 = vld [vmem:[%s12 + $0x4] sm:$0xf]
    %v586 = vld [vmem:[%s12 + $0x8] sm:$0xf]
    %v587 = vld [vmem:[%s12 + $0xc] sm:$0xf]
    %v588 = vld [vmem:[%s12 + $0x10] sm:$0xf]
    %v589 = vld [vmem:[%s12 + $0x14] sm:$0xf]
    %v590 = vld [vmem:[%s12 + $0x18] sm:$0xf]
    %v591 = vld [vmem:[%s12 + $0x1c] sm:$0xf]
    %v592 = vld [vmem:[%s13] sm:$0x1]
    %vm593 = vcmask 523264
    %v594 = vsel %vm593, %v580, 0.0
    %595 = vadd.xlane.f32.xlu0 %v594
    %v596 = vpop.xlane.xlu0 %595
    %v597 = vsel %vm593, %v581, 0.0
    %598 = vadd.xlane.f32.xlu0 %v597
    %v599 = vpop.xlane.xlu0 %598
    %v600 = vrcp.pop 64.0
    %v601 = vmul.f32 64.0, %v600
    %v602 = vsub.f32 1.0, %v601
    %v603 = vmul.f32 %v600, %v602
    %v604 = vadd.f32 %v600, %v603
    %vm605 = vweird.f32 %v600
    %v606 = vsel %vm605, %v600, %v604
    %v607 = vmul.f32 %v596, %v606
    %v608 = vmul.f32 %v599, %v606
    %v609 = vsub.f32 %v580, %v607
    %v610 = vsub.f32 %v581, %v608
    %v611 = vmul.f32 %v609, %v609
    %v612 = vmul.f32 %v610, %v610
    %v613 = vsel %vm593, %v611, 0.0
    %614 = vadd.xlane.f32.xlu0 %v613
    %v615 = vpop.xlane.xlu0 %614
    %v616 = vsel %vm593, %v612, 0.0
    %617 = vadd.xlane.f32.xlu0 %v616
    %v618 = vpop.xlane.xlu0 %617
    %v619 = vmul.f32 %v615, %v606
    %v620 = vmul.f32 %v618, %v606
    %v621 = vadd.f32 %v619, 1e-05
    %v622 = vadd.f32 %v620, 1e-05
    %v623 = vrsqrt.pop %v621
    %v624 = vmul.f32 %v623, %v621
    %v625 = vmul.f32 %v624, %v623
    %v626 = vmul.f32 0.5, %v625
    %v627 = vsub.f32 1.5, %v626
    %v628 = vmul.f32 %v623, %v627
    %vm629 = vweird.f32 %v621
    %vm630 = vweird.f32 %v623
    %vm631 = vmor %vm629, %vm630
    %v632 = vsel %vm631, %v623, %v628
    %v633 = vrsqrt.pop %v622
    %v634 = vmul.f32 %v633, %v622
    %v635 = vmul.f32 %v634, %v633
    %v636 = vmul.f32 0.5, %v635
    %v637 = vsub.f32 1.5, %v636
    %v638 = vmul.f32 %v633, %v637
    %vm639 = vweird.f32 %v622
    %vm640 = vweird.f32 %v633
    %vm641 = vmor %vm639, %vm640
    %v642 = vsel %vm641, %v633, %v638
    %v643 = vmul.f32 %v609, %v632
    %v644 = vmul.f32 %v610, %v642
    %v646 = vperm.slane %v582, 0
    %v648 = vmul.f32 %v643, %v646
    %v649 = vmul.f32 %v644, %v646
    %v651 = vperm.slane %v583, 0
    %v653 = vadd.f32 %v648, %v651
    %v654 = vadd.f32 %v649, %v651
    %v655 = vmul.f32 %v653, 1.75
    %v656 = vmul.f32 %v654, 1.75
    %v657 = vxor.u32 %v580, 2147483648
    %v658 = vxor.u32 %v581, 2147483648
    %v659 = vmul.f32 %v657, 1.442695
    %v660 = vpow.pop %v659
    %v661 = vmul.f32 %v658, 1.442695
    %v662 = vpow.pop %v661
    %v663 = vadd.f32 %v660, 1.0
    %v664 = vadd.f32 %v662, 1.0
    %v665 = vrcp.pop %v663
    %v666 = vmul.f32 %v663, %v665
    %v667 = vsub.f32 1.0, %v666
    %v668 = vmul.f32 %v665, %v667
    %v669 = vadd.f32 %v665, %v668
    %vm670 = vweird.f32 %v663
    %vm671 = vweird.f32 %v665
    %vm672 = vmor %vm670, %vm671
    %v673 = vsel %vm672, %v665, %v669
    %v674 = vand.u32 2147483647, %v663
    %vm675 = vcmp.eq.f32.partialorder %v674, 8.507059e+37
    %v676 = vand.u32 %v663, 2147483648
    %v677 = vor.u32 1.1754944e-38, %v676
    %v678 = vsel %vm675, %v677, %v673
    %v679 = vmul.f32 1.0, %v678
    %v680 = vrcp.pop %v664
    %v681 = vmul.f32 %v664, %v680
    %v682 = vsub.f32 1.0, %v681
    %v683 = vmul.f32 %v680, %v682
    %v684 = vadd.f32 %v680, %v683
    %vm685 = vweird.f32 %v664
    %vm686 = vweird.f32 %v680
    %vm687 = vmor %vm685, %vm686
    %v688 = vsel %vm687, %v680, %v684
    %v689 = vand.u32 2147483647, %v664
    %vm690 = vcmp.eq.f32.partialorder %v689, 8.507059e+37
    %v691 = vand.u32 %v664, 2147483648
    %v692 = vor.u32 1.1754944e-38, %v691
    %v693 = vsel %vm690, %v692, %v688
    %v694 = vmul.f32 1.0, %v693
    %v695 = vmul.f32 %v580, %v679
    %v696 = vmul.f32 %v581, %v694
    %v697 = vpack.c.bf16 %v696, %v695
    %v699 = vperm.slane %v592, 0
    %v709 = vunpack.c.l.b16 %v584
    %v710 = vunpack.c.l.b16 %v585
    %v711 = vunpack.c.l.b16 %v586
    %v712 = vunpack.c.l.b16 %v587
    %v713 = vunpack.c.l.b16 %v588
    %v714 = vunpack.c.l.b16 %v589
    %v715 = vunpack.c.l.b16 %v590
    %v716 = vunpack.c.l.b16 %v591
    %v717 = vpack.c.b16 %v710, %v709
    %v718 = vpack.c.b16 %v712, %v711
    %v719 = vpack.c.b16 %v714, %v713
    %v720 = vpack.c.b16 %v716, %v715
    %v726 = vsel %vm593, %v697, 0
    %728 = vmatpush.bf16.msra.mxu0 0
    %729 = vmatpush.bf16.msra.mxu0 0
    %730 = vmatpush.bf16.msra.mxu0 0
    %731 = vmatpush.bf16.msra.mxu0 0
    %732 = vmatpush.bf16.msra.mxu0 %v720
    %733 = vmatpush.bf16.msra.mxu0 %v719
    %734 = vmatpush.bf16.msra.mxu0 %v718
    %735 = vmatpush.bf16.msra.mxu0 %v717
    %736 = vmatmul.bf16.gmra.mxu0 %v726
    %v737 = vpop.f32.mrf.mxu0
    %v738 = vadd.f32 %v699, %v737
    %v739 = vpop.f32.mrf.mxu0
    %v740 = vadd.f32 %v699, %v739
    %741 = vdwg.mxu0
    %v742 = vsub.f32 %v655, -3.5
    %v743 = vsub.f32 %v656, -3.5
    %v744 = vmul.f32 %v742, %v742
    %v745 = vmul.f32 %v743, %v743
    %v746 = vsub.f32 0.0, %v744
    %v747 = vsub.f32 0.0, %v745
    %v748 = vmul.f32 %v746, 1.442695
    %v749 = vpow.pop %v748
    %v750 = vmul.f32 %v747, 1.442695
    %v751 = vpow.pop %v750
    %v752 = vpack.c.bf16 %v751, %v749
    %v753 = vld [vmem:[%s11] sm:$0xf]
    %v754 = vld [vmem:[%s11 + $0x4] sm:$0xf]
    %v755 = vld [vmem:[%s11 + $0x8] sm:$0xf]
    %v756 = vld [vmem:[%s11 + $0xc] sm:$0xf]
    %v757 = vld [vmem:[%s11 + $0x10] sm:$0xf]
    %v758 = vld [vmem:[%s11 + $0x14] sm:$0xf]
    %v759 = vld [vmem:[%s11 + $0x18] sm:$0xf]
    %v760 = vld [vmem:[%s11 + $0x1c] sm:$0xf]
    %v769 = vunpack.c.l.b16 %v753
    %v770 = vunpack.c.l.b16 %v754
    %v771 = vunpack.c.l.b16 %v755
    %v772 = vunpack.c.l.b16 %v756
    %v773 = vunpack.c.l.b16 %v757
    %v774 = vunpack.c.l.b16 %v758
    %v775 = vunpack.c.l.b16 %v759
    %v776 = vunpack.c.l.b16 %v760
    %v777 = vpack.c.b16 %v770, %v769
    %v778 = vpack.c.b16 %v772, %v771
    %v779 = vpack.c.b16 %v774, %v773
    %v780 = vpack.c.b16 %v776, %v775
    %v786 = vsel %vm593, %v752, 0
    %788 = vmatpush.bf16.msra.mxu0 0
    %789 = vmatpush.bf16.msra.mxu0 0
    %790 = vmatpush.bf16.msra.mxu0 0
    %791 = vmatpush.bf16.msra.mxu0 0
    %792 = vmatpush.bf16.msra.mxu0 %v780
    %793 = vmatpush.bf16.msra.mxu0 %v779
    %794 = vmatpush.bf16.msra.mxu0 %v778
    %795 = vmatpush.bf16.msra.mxu0 %v777
    %796 = vmatmul.bf16.gmra.mxu0 %v786
    %v797 = vpop.f32.mrf.mxu0
    %v798 = vadd.f32 0.0, %v797
    %v799 = vpop.f32.mrf.mxu0
    %v800 = vadd.f32 0.0, %v799
    %801 = vdwg.mxu0
    %v802 = vadd.f32 %v738, %v798
    %v803 = vadd.f32 %v740, %v800
    %v804 = vsub.f32 %v655, -2.5
    %v805 = vsub.f32 %v656, -2.5
    %v806 = vmul.f32 %v804, %v804
    %v807 = vmul.f32 %v805, %v805
    %v808 = vsub.f32 0.0, %v806
    %v809 = vsub.f32 0.0, %v807
    %v810 = vmul.f32 %v808, 1.442695
    %v811 = vpow.pop %v810
    %v812 = vmul.f32 %v809, 1.442695
    %v813 = vpow.pop %v812
    %v814 = vpack.c.bf16 %v813, %v811
    %s815 = scalar_lea.vmem %s11, 32
    %v816 = vld [vmem:[%s815] sm:$0xf]
    %v817 = vld [vmem:[%s815 + $0x4] sm:$0xf]
    %v818 = vld [vmem:[%s815 + $0x8] sm:$0xf]
    %v819 = vld [vmem:[%s815 + $0xc] sm:$0xf]
    %v820 = vld [vmem:[%s815 + $0x10] sm:$0xf]
    %v821 = vld [vmem:[%s815 + $0x14] sm:$0xf]
    %v822 = vld [vmem:[%s815 + $0x18] sm:$0xf]
    %v823 = vld [vmem:[%s815 + $0x1c] sm:$0xf]
    %v832 = vunpack.c.l.b16 %v816
    %v833 = vunpack.c.l.b16 %v817
    %v834 = vunpack.c.l.b16 %v818
    %v835 = vunpack.c.l.b16 %v819
    %v836 = vunpack.c.l.b16 %v820
    %v837 = vunpack.c.l.b16 %v821
    %v838 = vunpack.c.l.b16 %v822
    %v839 = vunpack.c.l.b16 %v823
    %v840 = vpack.c.b16 %v833, %v832
    %v841 = vpack.c.b16 %v835, %v834
    %v842 = vpack.c.b16 %v837, %v836
    %v843 = vpack.c.b16 %v839, %v838
    %v849 = vsel %vm593, %v814, 0
    %851 = vmatpush.bf16.msra.mxu0 0
    %852 = vmatpush.bf16.msra.mxu0 0
    %853 = vmatpush.bf16.msra.mxu0 0
    %854 = vmatpush.bf16.msra.mxu0 0
    %855 = vmatpush.bf16.msra.mxu0 %v843
    %856 = vmatpush.bf16.msra.mxu0 %v842
    %857 = vmatpush.bf16.msra.mxu0 %v841
    %858 = vmatpush.bf16.msra.mxu0 %v840
    %859 = vmatmul.bf16.gmra.mxu0 %v849
    %v860 = vpop.f32.mrf.mxu0
    %v861 = vadd.f32 0.0, %v860
    %v862 = vpop.f32.mrf.mxu0
    %v863 = vadd.f32 0.0, %v862
    %864 = vdwg.mxu0
    %v865 = vadd.f32 %v802, %v861
    %v866 = vadd.f32 %v803, %v863
    %v867 = vsub.f32 %v655, -1.5
    %v868 = vsub.f32 %v656, -1.5
    %v869 = vmul.f32 %v867, %v867
    %v870 = vmul.f32 %v868, %v868
    %v871 = vsub.f32 0.0, %v869
    %v872 = vsub.f32 0.0, %v870
    %v873 = vmul.f32 %v871, 1.442695
    %v874 = vpow.pop %v873
    %v875 = vmul.f32 %v872, 1.442695
    %v876 = vpow.pop %v875
    %v877 = vpack.c.bf16 %v876, %v874
    %s878 = scalar_lea.vmem %s11, 64
    %v879 = vld [vmem:[%s878] sm:$0xf]
    %v880 = vld [vmem:[%s878 + $0x4] sm:$0xf]
    %v881 = vld [vmem:[%s878 + $0x8] sm:$0xf]
    %v882 = vld [vmem:[%s878 + $0xc] sm:$0xf]
    %v883 = vld [vmem:[%s878 + $0x10] sm:$0xf]
    %v884 = vld [vmem:[%s878 + $0x14] sm:$0xf]
    %v885 = vld [vmem:[%s878 + $0x18] sm:$0xf]
    %v886 = vld [vmem:[%s878 + $0x1c] sm:$0xf]
    %v895 = vunpack.c.l.b16 %v879
    %v896 = vunpack.c.l.b16 %v880
    %v897 = vunpack.c.l.b16 %v881
    %v898 = vunpack.c.l.b16 %v882
    %v899 = vunpack.c.l.b16 %v883
    %v900 = vunpack.c.l.b16 %v884
    %v901 = vunpack.c.l.b16 %v885
    %v902 = vunpack.c.l.b16 %v886
    %v903 = vpack.c.b16 %v896, %v895
    %v904 = vpack.c.b16 %v898, %v897
    %v905 = vpack.c.b16 %v900, %v899
    %v906 = vpack.c.b16 %v902, %v901
    %v912 = vsel %vm593, %v877, 0
    %914 = vmatpush.bf16.msra.mxu0 0
    %915 = vmatpush.bf16.msra.mxu0 0
    %916 = vmatpush.bf16.msra.mxu0 0
    %917 = vmatpush.bf16.msra.mxu0 0
    %918 = vmatpush.bf16.msra.mxu0 %v906
    %919 = vmatpush.bf16.msra.mxu0 %v905
    %920 = vmatpush.bf16.msra.mxu0 %v904
    %921 = vmatpush.bf16.msra.mxu0 %v903
    %922 = vmatmul.bf16.gmra.mxu0 %v912
    %v923 = vpop.f32.mrf.mxu0
    %v924 = vadd.f32 0.0, %v923
    %v925 = vpop.f32.mrf.mxu0
    %v926 = vadd.f32 0.0, %v925
    %927 = vdwg.mxu0
    %v928 = vadd.f32 %v865, %v924
    %v929 = vadd.f32 %v866, %v926
    %v930 = vsub.f32 %v655, -0.5
    %v931 = vsub.f32 %v656, -0.5
    %v932 = vmul.f32 %v930, %v930
    %v933 = vmul.f32 %v931, %v931
    %v934 = vsub.f32 0.0, %v932
    %v935 = vsub.f32 0.0, %v933
    %v936 = vmul.f32 %v934, 1.442695
    %v937 = vpow.pop %v936
    %v938 = vmul.f32 %v935, 1.442695
    %v939 = vpow.pop %v938
    %v940 = vpack.c.bf16 %v939, %v937
    %s941 = scalar_lea.vmem %s11, 96
    %v942 = vld [vmem:[%s941] sm:$0xf]
    %v943 = vld [vmem:[%s941 + $0x4] sm:$0xf]
    %v944 = vld [vmem:[%s941 + $0x8] sm:$0xf]
    %v945 = vld [vmem:[%s941 + $0xc] sm:$0xf]
    %v946 = vld [vmem:[%s941 + $0x10] sm:$0xf]
    %v947 = vld [vmem:[%s941 + $0x14] sm:$0xf]
    %v948 = vld [vmem:[%s941 + $0x18] sm:$0xf]
    %v949 = vld [vmem:[%s941 + $0x1c] sm:$0xf]
    %v958 = vunpack.c.l.b16 %v942
    %v959 = vunpack.c.l.b16 %v943
    %v960 = vunpack.c.l.b16 %v944
    %v961 = vunpack.c.l.b16 %v945
    %v962 = vunpack.c.l.b16 %v946
    %v963 = vunpack.c.l.b16 %v947
    %v964 = vunpack.c.l.b16 %v948
    %v965 = vunpack.c.l.b16 %v949
    %v966 = vpack.c.b16 %v959, %v958
    %v967 = vpack.c.b16 %v961, %v960
    %v968 = vpack.c.b16 %v963, %v962
    %v969 = vpack.c.b16 %v965, %v964
    %v975 = vsel %vm593, %v940, 0
    %977 = vmatpush.bf16.msra.mxu0 0
    %978 = vmatpush.bf16.msra.mxu0 0
    %979 = vmatpush.bf16.msra.mxu0 0
    %980 = vmatpush.bf16.msra.mxu0 0
    %981 = vmatpush.bf16.msra.mxu0 %v969
    %982 = vmatpush.bf16.msra.mxu0 %v968
    %983 = vmatpush.bf16.msra.mxu0 %v967
    %984 = vmatpush.bf16.msra.mxu0 %v966
    %985 = vmatmul.bf16.gmra.mxu0 %v975
    %v986 = vpop.f32.mrf.mxu0
    %v987 = vadd.f32 0.0, %v986
    %v988 = vpop.f32.mrf.mxu0
    %v989 = vadd.f32 0.0, %v988
    %990 = vdwg.mxu0
    %v991 = vadd.f32 %v928, %v987
    %v992 = vadd.f32 %v929, %v989
    %v993 = vsub.f32 %v655, 0.5
    %v994 = vsub.f32 %v656, 0.5
    %v995 = vmul.f32 %v993, %v993
    %v996 = vmul.f32 %v994, %v994
    %v997 = vsub.f32 0.0, %v995
    %v998 = vsub.f32 0.0, %v996
    %v999 = vmul.f32 %v997, 1.442695
    %v1000 = vpow.pop %v999
    %v1001 = vmul.f32 %v998, 1.442695
    %v1002 = vpow.pop %v1001
    %v1003 = vpack.c.bf16 %v1002, %v1000
    %s1004 = scalar_lea.vmem %s11, 128
    %v1005 = vld [vmem:[%s1004] sm:$0xf]
    %v1006 = vld [vmem:[%s1004 + $0x4] sm:$0xf]
    %v1007 = vld [vmem:[%s1004 + $0x8] sm:$0xf]
    %v1008 = vld [vmem:[%s1004 + $0xc] sm:$0xf]
    %v1009 = vld [vmem:[%s1004 + $0x10] sm:$0xf]
    %v1010 = vld [vmem:[%s1004 + $0x14] sm:$0xf]
    %v1011 = vld [vmem:[%s1004 + $0x18] sm:$0xf]
    %v1012 = vld [vmem:[%s1004 + $0x1c] sm:$0xf]
    %v1021 = vunpack.c.l.b16 %v1005
    %v1022 = vunpack.c.l.b16 %v1006
    %v1023 = vunpack.c.l.b16 %v1007
    %v1024 = vunpack.c.l.b16 %v1008
    %v1025 = vunpack.c.l.b16 %v1009
    %v1026 = vunpack.c.l.b16 %v1010
    %v1027 = vunpack.c.l.b16 %v1011
    %v1028 = vunpack.c.l.b16 %v1012
    %v1029 = vpack.c.b16 %v1022, %v1021
    %v1030 = vpack.c.b16 %v1024, %v1023
    %v1031 = vpack.c.b16 %v1026, %v1025
    %v1032 = vpack.c.b16 %v1028, %v1027
    %v1038 = vsel %vm593, %v1003, 0
    %1040 = vmatpush.bf16.msra.mxu0 0
    %1041 = vmatpush.bf16.msra.mxu0 0
    %1042 = vmatpush.bf16.msra.mxu0 0
    %1043 = vmatpush.bf16.msra.mxu0 0
    %1044 = vmatpush.bf16.msra.mxu0 %v1032
    %1045 = vmatpush.bf16.msra.mxu0 %v1031
    %1046 = vmatpush.bf16.msra.mxu0 %v1030
    %1047 = vmatpush.bf16.msra.mxu0 %v1029
    %1048 = vmatmul.bf16.gmra.mxu0 %v1038
    %v1049 = vpop.f32.mrf.mxu0
    %v1050 = vadd.f32 0.0, %v1049
    %v1051 = vpop.f32.mrf.mxu0
    %v1052 = vadd.f32 0.0, %v1051
    %1053 = vdwg.mxu0
    %v1054 = vadd.f32 %v991, %v1050
    %v1055 = vadd.f32 %v992, %v1052
    %v1056 = vsub.f32 %v655, 1.5
    %v1057 = vsub.f32 %v656, 1.5
    %v1058 = vmul.f32 %v1056, %v1056
    %v1059 = vmul.f32 %v1057, %v1057
    %v1060 = vsub.f32 0.0, %v1058
    %v1061 = vsub.f32 0.0, %v1059
    %v1062 = vmul.f32 %v1060, 1.442695
    %v1063 = vpow.pop %v1062
    %v1064 = vmul.f32 %v1061, 1.442695
    %v1065 = vpow.pop %v1064
    %v1066 = vpack.c.bf16 %v1065, %v1063
    %s1067 = scalar_lea.vmem %s11, 160
    %v1068 = vld [vmem:[%s1067] sm:$0xf]
    %v1069 = vld [vmem:[%s1067 + $0x4] sm:$0xf]
    %v1070 = vld [vmem:[%s1067 + $0x8] sm:$0xf]
    %v1071 = vld [vmem:[%s1067 + $0xc] sm:$0xf]
    %v1072 = vld [vmem:[%s1067 + $0x10] sm:$0xf]
    %v1073 = vld [vmem:[%s1067 + $0x14] sm:$0xf]
    %v1074 = vld [vmem:[%s1067 + $0x18] sm:$0xf]
    %v1075 = vld [vmem:[%s1067 + $0x1c] sm:$0xf]
    %v1084 = vunpack.c.l.b16 %v1068
    %v1085 = vunpack.c.l.b16 %v1069
    %v1086 = vunpack.c.l.b16 %v1070
    %v1087 = vunpack.c.l.b16 %v1071
    %v1088 = vunpack.c.l.b16 %v1072
    %v1089 = vunpack.c.l.b16 %v1073
    %v1090 = vunpack.c.l.b16 %v1074
    %v1091 = vunpack.c.l.b16 %v1075
    %v1092 = vpack.c.b16 %v1085, %v1084
    %v1093 = vpack.c.b16 %v1087, %v1086
    %v1094 = vpack.c.b16 %v1089, %v1088
    %v1095 = vpack.c.b16 %v1091, %v1090
    %v1101 = vsel %vm593, %v1066, 0
    %1103 = vmatpush.bf16.msra.mxu0 0
    %1104 = vmatpush.bf16.msra.mxu0 0
    %1105 = vmatpush.bf16.msra.mxu0 0
    %1106 = vmatpush.bf16.msra.mxu0 0
    %1107 = vmatpush.bf16.msra.mxu0 %v1095
    %1108 = vmatpush.bf16.msra.mxu0 %v1094
    %1109 = vmatpush.bf16.msra.mxu0 %v1093
    %1110 = vmatpush.bf16.msra.mxu0 %v1092
    %1111 = vmatmul.bf16.gmra.mxu0 %v1101
    %v1112 = vpop.f32.mrf.mxu0
    %v1113 = vadd.f32 0.0, %v1112
    %v1114 = vpop.f32.mrf.mxu0
    %v1115 = vadd.f32 0.0, %v1114
    %1116 = vdwg.mxu0
    %v1117 = vadd.f32 %v1054, %v1113
    %v1118 = vadd.f32 %v1055, %v1115
    %v1119 = vsub.f32 %v655, 2.5
    %v1120 = vsub.f32 %v656, 2.5
    %v1121 = vmul.f32 %v1119, %v1119
    %v1122 = vmul.f32 %v1120, %v1120
    %v1123 = vsub.f32 0.0, %v1121
    %v1124 = vsub.f32 0.0, %v1122
    %v1125 = vmul.f32 %v1123, 1.442695
    %v1126 = vpow.pop %v1125
    %v1127 = vmul.f32 %v1124, 1.442695
    %v1128 = vpow.pop %v1127
    %v1129 = vpack.c.bf16 %v1128, %v1126
    %s1130 = scalar_lea.vmem %s11, 192
    %v1131 = vld [vmem:[%s1130] sm:$0xf]
    %v1132 = vld [vmem:[%s1130 + $0x4] sm:$0xf]
    %v1133 = vld [vmem:[%s1130 + $0x8] sm:$0xf]
    %v1134 = vld [vmem:[%s1130 + $0xc] sm:$0xf]
    %v1135 = vld [vmem:[%s1130 + $0x10] sm:$0xf]
    %v1136 = vld [vmem:[%s1130 + $0x14] sm:$0xf]
    %v1137 = vld [vmem:[%s1130 + $0x18] sm:$0xf]
    %v1138 = vld [vmem:[%s1130 + $0x1c] sm:$0xf]
    %v1147 = vunpack.c.l.b16 %v1131
    %v1148 = vunpack.c.l.b16 %v1132
    %v1149 = vunpack.c.l.b16 %v1133
    %v1150 = vunpack.c.l.b16 %v1134
    %v1151 = vunpack.c.l.b16 %v1135
    %v1152 = vunpack.c.l.b16 %v1136
    %v1153 = vunpack.c.l.b16 %v1137
    %v1154 = vunpack.c.l.b16 %v1138
    %v1155 = vpack.c.b16 %v1148, %v1147
    %v1156 = vpack.c.b16 %v1150, %v1149
    %v1157 = vpack.c.b16 %v1152, %v1151
    %v1158 = vpack.c.b16 %v1154, %v1153
    %v1164 = vsel %vm593, %v1129, 0
    %1166 = vmatpush.bf16.msra.mxu0 0
    %1167 = vmatpush.bf16.msra.mxu0 0
    %1168 = vmatpush.bf16.msra.mxu0 0
    %1169 = vmatpush.bf16.msra.mxu0 0
    %1170 = vmatpush.bf16.msra.mxu0 %v1158
    %1171 = vmatpush.bf16.msra.mxu0 %v1157
    %1172 = vmatpush.bf16.msra.mxu0 %v1156
    %1173 = vmatpush.bf16.msra.mxu0 %v1155
    %1174 = vmatmul.bf16.gmra.mxu0 %v1164
    %v1175 = vpop.f32.mrf.mxu0
    %v1176 = vadd.f32 0.0, %v1175
    %v1177 = vpop.f32.mrf.mxu0
    %v1178 = vadd.f32 0.0, %v1177
    %1179 = vdwg.mxu0
    %v1180 = vadd.f32 %v1117, %v1176
    %v1181 = vadd.f32 %v1118, %v1178
    %v1182 = vsub.f32 %v655, 3.5
    %v1183 = vsub.f32 %v656, 3.5
    %v1184 = vmul.f32 %v1182, %v1182
    %v1185 = vmul.f32 %v1183, %v1183
    %v1186 = vsub.f32 0.0, %v1184
    %v1187 = vsub.f32 0.0, %v1185
    %v1188 = vmul.f32 %v1186, 1.442695
    %v1189 = vpow.pop %v1188
    %v1190 = vmul.f32 %v1187, 1.442695
    %v1191 = vpow.pop %v1190
    %v1192 = vpack.c.bf16 %v1191, %v1189
    %s1193 = scalar_lea.vmem %s11, 224
    %v1194 = vld [vmem:[%s1193] sm:$0xf]
    %v1195 = vld [vmem:[%s1193 + $0x4] sm:$0xf]
    %v1196 = vld [vmem:[%s1193 + $0x8] sm:$0xf]
    %v1197 = vld [vmem:[%s1193 + $0xc] sm:$0xf]
    %v1198 = vld [vmem:[%s1193 + $0x10] sm:$0xf]
    %v1199 = vld [vmem:[%s1193 + $0x14] sm:$0xf]
    %v1200 = vld [vmem:[%s1193 + $0x18] sm:$0xf]
    %v1201 = vld [vmem:[%s1193 + $0x1c] sm:$0xf]
    %v1210 = vunpack.c.l.b16 %v1194
    %v1211 = vunpack.c.l.b16 %v1195
    %v1212 = vunpack.c.l.b16 %v1196
    %v1213 = vunpack.c.l.b16 %v1197
    %v1214 = vunpack.c.l.b16 %v1198
    %v1215 = vunpack.c.l.b16 %v1199
    %v1216 = vunpack.c.l.b16 %v1200
    %v1217 = vunpack.c.l.b16 %v1201
    %v1218 = vpack.c.b16 %v1211, %v1210
    %v1219 = vpack.c.b16 %v1213, %v1212
    %v1220 = vpack.c.b16 %v1215, %v1214
    %v1221 = vpack.c.b16 %v1217, %v1216
    %v1227 = vsel %vm593, %v1192, 0
    %1229 = vmatpush.bf16.msra.mxu0 0
    %1230 = vmatpush.bf16.msra.mxu0 0
    %1231 = vmatpush.bf16.msra.mxu0 0
    %1232 = vmatpush.bf16.msra.mxu0 0
    %1233 = vmatpush.bf16.msra.mxu0 %v1221
    %1234 = vmatpush.bf16.msra.mxu0 %v1220
    %1235 = vmatpush.bf16.msra.mxu0 %v1219
    %1236 = vmatpush.bf16.msra.mxu0 %v1218
    %1237 = vmatmul.bf16.gmra.mxu0 %v1227
    %v1238 = vpop.f32.mrf.mxu0
    %v1239 = vadd.f32 0.0, %v1238
    %v1240 = vpop.f32.mrf.mxu0
    %v1241 = vadd.f32 0.0, %v1240
    %1242 = vdwg.mxu0
    %v1243 = vadd.f32 %v1180, %v1239
    %v1244 = vadd.f32 %v1181, %v1241
    %v1245 = vld [vmem:[%s3] sm:$0x1]
    %v1247 = vperm.slane %v1245, 0
    %v1249 = vmul.f32 %v1247, %v1243
    %v1250 = vmul.f32 %v1247, %v1244
    %v1251 = vadd.f32 %v49, %v1249
    %v1252 = vadd.f32 %v50, %v1250
    %1253 = vst.msk [vmem:[#allocation2] sm:$0xff] %vm70, %v1251
    %1254 = vst.msk [vmem:[#allocation2 + $0x8] sm:$0xff] %vm70, %v1252
    // Predicated region
    $region58: #{reskan_block.3} parent=1 // pred_check
      _
    $region59: #{reskan_block.3} parent=1 // pred_check_branch
      %1256 = sbr.rel (0) target = $region61
    $region60: #{reskan_block.3} parent=1 // pred_region
      %1258 = vsyncadd [#allocation3], 0
      %s1259 = sshll.u32 [#allocation2], 4
      %s1260 = int_to_ptr.vmem [resolvable:$true] %s1259
      %s1261 = sshll.u32 %s14, 4
      %s1262 = int_to_ptr.hbm [resolvable:$true] %s1261
      %1267 = dma.vmem_to_hbm [thread:$0]  %s1260, 256, %s1262, [#allocation3], 128, 128, 8
    $region61: #{reskan_block.3} parent=1 // pred_fallthru
      _
    // Predicated region
    $region62: #{reskan_block.3} parent=1 // pred_check
      _
    $region63: #{reskan_block.3} parent=1 // pred_check_branch
      %1269 = sbr.rel (0) target = $region65
    $region64: #{reskan_block.3} parent=1 // pred_region
      %1271 = dma.done [#allocation3], 256
    $region65: #{reskan_block.3} parent=1 // pred_fallthru
      _
    %1272 = vsyncpa [#allocation3], 1

</llo_original>
